<compile_context>
chip_gen: v7x
topology: tpu7x:2x2x1
jax: 0.10.0
libtpu: 0.0.40
codegen_flags: <defaults>
</compile_context>

<pallas_src>
import jax
import jax.numpy as jnp
from jax import lax
from jax.experimental import pallas as pl
from jax.experimental.pallas import tpu as pltpu


# ---------------------------------------------------------------------------
# Wrapper-side (one-time, pure JAX) construction of the block-banded conv RHS.
# ---------------------------------------------------------------------------
def _band_onehot(width, dtype):
    # onehot[w_out, w_in, dx] = 1  iff  w_in == w_out + dx - 1   (dx in {0,1,2})
    w_out = jnp.arange(width)[:, None, None]
    w_in = jnp.arange(width)[None, :, None]
    dx = jnp.arange(3)[None, None, :]
    return (w_in == (w_out + dx - 1)).astype(dtype)


def _toeplitz_conv1_shuffled(w1, W, r):
    # w1: (3, 3, Cin, Cin*r*r) HWIO; torch PixelShuffle channel order ch = cc*r*r + i*r + j
    Cin = w1.shape[2]
    c = w1.shape[3] // (r * r)
    onehot = _band_onehot(W, w1.dtype)                     # (w, wi, dx)
    w1_t = w1.reshape(3, 3, Cin, c, r, r)                  # (dy, dx, ci, cc, i, j)
    # T[dy, wi, ci, i, w, j, cc] = w1[dy, wi-w+1, ci, cc*r*r+i*r+j] (banded)
    T = jnp.einsum('wpx,dxqbij->dpqiwjb', onehot, w1_t)
    B = T.reshape(3 * W * Cin, r, W * r * c)
    # B[:, i, :] produces rows h*r + i of the shuffled activation, lane-dense (w_up, ch)
    return [B[:, i, :] for i in range(r)]


def _toeplitz_conv2(w2, Wr):
    c, Cout = w2.shape[2], w2.shape[3]
    onehot = _band_onehot(Wr, w2.dtype)                    # (w, wi, dx)
    T = jnp.einsum('wpx,dxqo->dpqwo', onehot, w2)          # (dy, wi, ci, w, oc)
    return T.reshape(3 * Wr * c, Wr * Cout)


# ---------------------------------------------------------------------------
# Fused forward pass
# ---------------------------------------------------------------------------
def shuffle_up_block(x, w1, w2, gamma, beta, alpha, up_scale, eps=1e-5):
    """x: (N, H, W, Cin) NHWC. Returns (N, H*r, W*r, Cout)."""
    # TODO(synk): kernel specialized for up_scale == 2 (the module's usual config);
    # other factors need a different even/odd row decomposition.
    assert up_scale == 2, "fused kernel specialized for up_scale=2"
    N, H, W, Cin = x.shape
    r = up_scale
    c = Cin                        # channels after PixelShuffle
    Cout = w2.shape[-1]
    Hr, Wr = H * r, W * r
    K1 = 3 * W * Cin               # conv1 contraction depth (192)
    K2 = 3 * Wr * c                # conv2 contraction depth (384)
    L1 = Wr * c                    # lane width of shuffled-activation rows (128)
    L2 = Wr * Cout                 # lane width of conv2 / output rows (256)

    b1_even, b1_odd = _toeplitz_conv1_shuffled(w1, W, r)   # (K1, L1) each
    b2 = _toeplitz_conv2(w2, Wr)                           # (K2, L2)
    # BatchNorm per-channel fold / broadcast matrices for the (w, oc) lane layout
    fold = jnp.tile(jnp.eye(Cout, dtype=jnp.float32), (Wr, 1))               # (L2, Cout)
    bcast = fold.T                                                           # (Cout, L2)
    gamma_t = jnp.tile(gamma.reshape(1, Cout).astype(jnp.float32), (1, Wr))  # (1, L2)
    beta_t = jnp.tile(beta.reshape(1, Cout).astype(jnp.float32), (1, Wr))    # (1, L2)
    x_m = x.reshape(N, H, W * Cin).astype(jnp.float32)                       # lane-merged input
    alpha_s = alpha.reshape((1,)).astype(jnp.float32)                        # SMEM scalar
    cnt = float(N * Hr * Wr)

    def kernel(x_ref, b1e_ref, b1o_ref, b2_ref, fold_ref, bcast_ref,
               gamma_ref, beta_ref, alpha_ref, o_ref):
        f32 = jnp.float32
        a = alpha_ref[0]                                   # shared PReLU alpha (SMEM)

        # ---- conv1 (3x3 SAME) + fused PixelShuffle + PReLU ------------------
        xv = x_ref[...]                                    # (N, H, W*Cin)
        zrow1 = jnp.zeros((N, 1, W * Cin), f32)
        xh = jnp.concatenate([zrow1, xv, zrow1], axis=1)   # vertical zero pad
        lhs1 = jnp.concatenate([xh[:, d:d + H, :] for d in range(3)], axis=2)
        lhs1 = lhs1.reshape(N * H, K1)                     # (N*H, 192)

        even = jnp.dot(lhs1, b1e_ref[...], preferred_element_type=f32)   # (N*H, L1)
        odd = jnp.dot(lhs1, b1o_ref[...], preferred_element_type=f32)    # (N*H, L1)
        even = jnp.where(even > 0, even, a * even)         # PReLU
        odd = jnp.where(odd > 0, odd, a * odd)
        # `even` / `odd` are the even / odd rows of the shuffled activation y1,
        # already lane-dense as (w_up, channel).

        # ---- conv2 (3x3 SAME): output row hr uses y1 rows hr-1, hr, hr+1 ----
        zrow2 = jnp.zeros((N, 1, L1), f32)
        ep = jnp.concatenate([zrow2, even.reshape(N, H, L1), zrow2], axis=1)
        op = jnp.concatenate([zrow2, odd.reshape(N, H, L1), zrow2], axis=1)
        lhs_e = jnp.concatenate(                            # output rows 2h
            [op[:, 0:H, :], ep[:, 1:H + 1, :], op[:, 1:H + 1, :]], axis=2
        ).reshape(N * H, K2)
        lhs_o = jnp.concatenate(                            # output rows 2h+1
            [ep[:, 1:H + 1, :], op[:, 1:H + 1, :], ep[:, 2:H + 2, :]], axis=2
        ).reshape(N * H, K2)
        acc_e = jnp.dot(lhs_e, b2_ref[...], preferred_element_type=f32)  # (N*H, L2)
        acc_o = jnp.dot(lhs_o, b2_ref[...], preferred_element_type=f32)

        # ---- BatchNorm2d (training-mode biased batch stats over N, H, W) ----
        ssum = (jnp.sum(acc_e, axis=0, keepdims=True)
                + jnp.sum(acc_o, axis=0, keepdims=True))                  # (1, L2)
        ssq = (jnp.sum(acc_e * acc_e, axis=0, keepdims=True)
               + jnp.sum(acc_o * acc_o, axis=0, keepdims=True))           # (1, L2)
        stats = jnp.dot(jnp.concatenate([ssum, ssq], axis=0), fold_ref[...],
                        preferred_element_type=f32)                       # (2, Cout)
        mean = stats[0:1, :] / cnt
        var = jnp.maximum(stats[1:2, :] / cnt - mean * mean, 0.0)         # clamp >= 0
        mv = jnp.dot(jnp.concatenate([mean, var], axis=0), bcast_ref[...],
                     preferred_element_type=f32)                          # (2, L2)
        scale = gamma_ref[...] * lax.rsqrt(mv[1:2, :] + eps)              # (1, L2)
        shift = beta_ref[...] - mv[0:1, :] * scale

        z_e = acc_e * scale + shift
        z_o = acc_o * scale + shift
        z_e = jnp.where(z_e > 0, z_e, a * z_e)             # final PReLU
        z_o = jnp.where(z_o > 0, z_o, a * z_o)

        # lane-dense store: (N, H, r*Wr*Cout); even rows in [:L2], odd rows in [L2:]
        o_ref[:, :, 0:L2] = z_e.reshape(N, H, L2)
        o_ref[:, :, L2:2 * L2] = z_o.reshape(N, H, L2)

    out_flat = pl.pallas_call(
        kernel,
        out_shape=jax.ShapeDtypeStruct((N, H, r * L2), jnp.float32),
        grid=(1,),
        in_specs=[
            pl.BlockSpec((N, H, W * Cin), lambda i: (0, 0, 0)),
            pl.BlockSpec((K1, L1), lambda i: (0, 0)),
            pl.BlockSpec((K1, L1), lambda i: (0, 0)),
            pl.BlockSpec((K2, L2), lambda i: (0, 0)),
            pl.BlockSpec((L2, Cout), lambda i: (0, 0)),
            pl.BlockSpec((Cout, L2), lambda i: (0, 0)),
            pl.BlockSpec((1, L2), lambda i: (0, 0)),
            pl.BlockSpec((1, L2), lambda i: (0, 0)),
            pl.BlockSpec(memory_space=pltpu.MemorySpace.SMEM),   # PReLU alpha scalar
        ],
        out_specs=pl.BlockSpec((N, H, r * L2), lambda i: (0, 0, 0)),
        compiler_params=pltpu.CompilerParams(
            dimension_semantics=("arbitrary",)),
        cost_estimate=pl.CostEstimate(
            flops=int(2 * N * H * (2 * K1 * L1 + 2 * K2 * L2)),
            transcendentals=int(L2),
            bytes_accessed=int(4 * (x_m.size + 2 * b1_even.size + b2.size
                                    + fold.size + bcast.size + 2 * gamma_t.size
                                    + 1 + N * H * r * L2)),
        ),
    )(x_m, b1_even, b1_odd, b2, fold, bcast, gamma_t, beta_t, alpha_s)

    return out_flat.reshape(N, Hr, Wr, Cout)


# ---------------------------------------------------------------------------
# Pure-JAX reference (correctness check), using the original unpermuted weights
# ---------------------------------------------------------------------------
def pixel_shuffle_nhwc(x, r):
    N, H, W, C = x.shape
    c = C // (r * r)
    x = x.reshape(N, H, W, c, r, r)
    x = jnp.transpose(x, (0, 1, 4, 2, 5, 3))
    return x.reshape(N, H * r, W * r, c)


def ref_shuffle_up_block(x, w1, w2, gamma, beta, alpha, up_scale, eps=1e-5):
    dn = ('NHWC', 'HWIO', 'NHWC')
    a = alpha[0]
    y1 = lax.conv_general_dilated(x, w1, (1, 1), 'SAME', dimension_numbers=dn)
    y1 = pixel_shuffle_nhwc(y1, up_scale)
    y1 = jnp.where(y1 > 0, y1, a * y1)
    y2 = lax.conv_general_dilated(y1, w2, (1, 1), 'SAME', dimension_numbers=dn)
    mean = jnp.mean(y2, axis=(0, 1, 2))
    var = jnp.var(y2, axis=(0, 1, 2))
    y2 = (y2 - mean) / jnp.sqrt(var + eps) * gamma + beta
    return jnp.where(y2 > 0, y2, a * y2)


if __name__ == "__main__":
    # small shapes consistent with the module
    N, Cin, H, W = 2, 4, 16, 16
    up_scale = 2
    Cout = 8

    key = jax.random.PRNGKey(0)
    k_x, k_w1, k_w2 = jax.random.split(key, 3)

    x = jax.random.normal(k_x, (N, H, W, Cin), jnp.float32)              # NHWC
    w1 = 0.1 * jax.random.normal(k_w1, (3, 3, Cin, Cin * up_scale ** 2),
                                 jnp.float32)                            # HWIO
    w2 = 0.1 * jax.random.normal(k_w2, (3, 3, Cin, Cout), jnp.float32)   # HWIO
    gamma = jnp.ones((Cout,), jnp.float32)       # BatchNorm2d default weight
    beta = jnp.zeros((Cout,), jnp.float32)       # BatchNorm2d default bias
    alpha = jnp.full((1,), 0.25, jnp.float32)    # PReLU default (shared scalar)

    out = shuffle_up_block(x, w1, w2, gamma, beta, alpha, up_scale)
    out = jax.block_until_ready(out)

    ref = ref_shuffle_up_block(x, w1, w2, gamma, beta, alpha, up_scale)
    ref = jax.block_until_ready(ref)

    assert out.shape == (N, H * up_scale, W * up_scale, Cout)
    assert jnp.allclose(out, ref, rtol=1e-2, atol=1e-2), \
        float(jnp.max(jnp.abs(out - ref)))

    print("KERNEL_OK")
</pallas_src>

<mosaic_0001>
module attributes {stable_mosaic.version = 11 : i64} {
  func.func @kernel(%arg0: i32, %arg1: memref<2x16x64xf32, #tpu.memory_space<vmem>>, %arg2: memref<192x128xf32, #tpu.memory_space<vmem>>, %arg3: memref<192x128xf32, #tpu.memory_space<vmem>>, %arg4: memref<384x256xf32, #tpu.memory_space<vmem>>, %arg5: memref<256x8xf32, #tpu.memory_space<vmem>>, %arg6: memref<8x256xf32, #tpu.memory_space<vmem>>, %arg7: memref<1x256xf32, #tpu.memory_space<vmem>>, %arg8: memref<1x256xf32, #tpu.memory_space<vmem>>, %arg9: memref<1xf32, #tpu.memory_space<smem>>, %arg10: memref<2x16x512xf32, #tpu.memory_space<vmem>>) attributes {dimension_semantics = [#tpu.dimension_semantics<arbitrary>], iteration_bounds = array<i64: 1>, scalar_prefetch = 0 : i64, scratch_operands = 0 : i64, tpu.core_type = #tpu.core_type<tc>, window_params = [{pipeline_mode = #tpu.pipeline_mode<synchronous>, transform_indices = @transform_0, window_bounds = array<i64: 2, 16, 64>}, {pipeline_mode = #tpu.pipeline_mode<synchronous>, transform_indices = @transform_1, window_bounds = array<i64: 192, 128>}, {pipeline_mode = #tpu.pipeline_mode<synchronous>, transform_indices = @transform_2, window_bounds = array<i64: 192, 128>}, {pipeline_mode = #tpu.pipeline_mode<synchronous>, transform_indices = @transform_3, window_bounds = array<i64: 384, 256>}, {pipeline_mode = #tpu.pipeline_mode<synchronous>, transform_indices = @transform_4, window_bounds = array<i64: 256, 8>}, {pipeline_mode = #tpu.pipeline_mode<synchronous>, transform_indices = @transform_5, window_bounds = array<i64: 8, 256>}, {pipeline_mode = #tpu.pipeline_mode<synchronous>, transform_indices = @transform_6, window_bounds = array<i64: 1, 256>}, {pipeline_mode = #tpu.pipeline_mode<synchronous>, transform_indices = @transform_7, window_bounds = array<i64: 1, 256>}, {transform_indices = @transform_8, window_bounds = array<i64: 1>}, {pipeline_mode = #tpu.pipeline_mode<synchronous>, transform_indices = @transform_9, window_bounds = array<i64: 2, 16, 512>}]} {
    %c0 = arith.constant 0 : index
    %0 = memref.load %arg9[%c0] : memref<1xf32, #tpu.memory_space<smem>>
    %c0_0 = arith.constant 0 : index
    %c0_1 = arith.constant 0 : index
    %c0_2 = arith.constant 0 : index
    %1 = vector.load %arg1[%c0_0, %c0_1, %c0_2] : memref<2x16x64xf32, #tpu.memory_space<vmem>>, vector<2x16x64xf32>
    %cst = arith.constant 0.000000e+00 : f32
    %2 = vector.broadcast %cst : f32 to vector<2x1x64xf32>
    %3 = tpu.concatenate %2, %1, %2 in 1 : vector<2x1x64xf32>, vector<2x16x64xf32>, vector<2x1x64xf32> -> vector<2x18x64xf32>
    %4 = vector.extract_strided_slice %3 {offsets = [0, 0, 0], sizes = [2, 16, 64], strides = [1, 1, 1]} : vector<2x18x64xf32> to vector<2x16x64xf32>
    %5 = vector.extract_strided_slice %3 {offsets = [0, 1, 0], sizes = [2, 16, 64], strides = [1, 1, 1]} : vector<2x18x64xf32> to vector<2x16x64xf32>
    %6 = vector.extract_strided_slice %3 {offsets = [0, 2, 0], sizes = [2, 16, 64], strides = [1, 1, 1]} : vector<2x18x64xf32> to vector<2x16x64xf32>
    %7 = tpu.concatenate %4, %5, %6 in 2 : vector<2x16x64xf32>, vector<2x16x64xf32>, vector<2x16x64xf32> -> vector<2x16x192xf32>
    %8 = vector.shape_cast %7 : vector<2x16x192xf32> to vector<32x192xf32>
    %c0_3 = arith.constant 0 : index
    %c0_4 = arith.constant 0 : index
    %9 = vector.load %arg2[%c0_3, %c0_4] : memref<192x128xf32, #tpu.memory_space<vmem>>, vector<192x128xf32>
    %cst_5 = arith.constant dense<0.000000e+00> : vector<32x128xf32>
    %10 = tpu.matmul %8, %9, %cst_5 {dimension_numbers = #tpu.dot_dimension_numbers<[1], [0], [0], [1], [0, 0, 1, 1], [], []>} : vector<32x192xf32>, vector<192x128xf32>, vector<32x128xf32> -> vector<32x128xf32>
    %c0_6 = arith.constant 0 : index
    %c0_7 = arith.constant 0 : index
    %11 = vector.load %arg3[%c0_6, %c0_7] : memref<192x128xf32, #tpu.memory_space<vmem>>, vector<192x128xf32>
    %cst_8 = arith.constant dense<0.000000e+00> : vector<32x128xf32>
    %12 = tpu.matmul %8, %11, %cst_8 {dimension_numbers = #tpu.dot_dimension_numbers<[1], [0], [0], [1], [0, 0, 1, 1], [], []>} : vector<32x192xf32>, vector<192x128xf32>, vector<32x128xf32> -> vector<32x128xf32>
    %cst_9 = arith.constant 0.000000e+00 : f32
    %13 = vector.broadcast %cst_9 : f32 to vector<32x128xf32>
    %14 = arith.cmpf ogt, %10, %13 : vector<32x128xf32>
    %15 = vector.broadcast %0 : f32 to vector<32x128xf32>
    %16 = arith.mulf %15, %10 : vector<32x128xf32>
    %17 = arith.select %14, %10, %16 : vector<32x128xi1>, vector<32x128xf32>
    %cst_10 = arith.constant 0.000000e+00 : f32
    %18 = vector.broadcast %cst_10 : f32 to vector<32x128xf32>
    %19 = arith.cmpf ogt, %12, %18 : vector<32x128xf32>
    %20 = vector.broadcast %0 : f32 to vector<32x128xf32>
    %21 = arith.mulf %20, %12 : vector<32x128xf32>
    %22 = arith.select %19, %12, %21 : vector<32x128xi1>, vector<32x128xf32>
    %cst_11 = arith.constant 0.000000e+00 : f32
    %23 = vector.broadcast %cst_11 : f32 to vector<2x1x128xf32>
    %24 = vector.shape_cast %17 : vector<32x128xf32> to vector<2x16x128xf32>
    %25 = tpu.concatenate %23, %24, %23 in 1 : vector<2x1x128xf32>, vector<2x16x128xf32>, vector<2x1x128xf32> -> vector<2x18x128xf32>
    %26 = vector.shape_cast %22 : vector<32x128xf32> to vector<2x16x128xf32>
    %27 = tpu.concatenate %23, %26, %23 in 1 : vector<2x1x128xf32>, vector<2x16x128xf32>, vector<2x1x128xf32> -> vector<2x18x128xf32>
    %28 = vector.extract_strided_slice %27 {offsets = [0, 0, 0], sizes = [2, 16, 128], strides = [1, 1, 1]} : vector<2x18x128xf32> to vector<2x16x128xf32>
    %29 = vector.extract_strided_slice %25 {offsets = [0, 1, 0], sizes = [2, 16, 128], strides = [1, 1, 1]} : vector<2x18x128xf32> to vector<2x16x128xf32>
    %30 = vector.extract_strided_slice %27 {offsets = [0, 1, 0], sizes = [2, 16, 128], strides = [1, 1, 1]} : vector<2x18x128xf32> to vector<2x16x128xf32>
    %31 = tpu.concatenate %28, %29, %30 in 2 : vector<2x16x128xf32>, vector<2x16x128xf32>, vector<2x16x128xf32> -> vector<2x16x384xf32>
    %32 = vector.shape_cast %31 : vector<2x16x384xf32> to vector<32x384xf32>
    %33 = vector.extract_strided_slice %25 {offsets = [0, 1, 0], sizes = [2, 16, 128], strides = [1, 1, 1]} : vector<2x18x128xf32> to vector<2x16x128xf32>
    %34 = vector.extract_strided_slice %27 {offsets = [0, 1, 0], sizes = [2, 16, 128], strides = [1, 1, 1]} : vector<2x18x128xf32> to vector<2x16x128xf32>
    %35 = vector.extract_strided_slice %25 {offsets = [0, 2, 0], sizes = [2, 16, 128], strides = [1, 1, 1]} : vector<2x18x128xf32> to vector<2x16x128xf32>
    %36 = tpu.concatenate %33, %34, %35 in 2 : vector<2x16x128xf32>, vector<2x16x128xf32>, vector<2x16x128xf32> -> vector<2x16x384xf32>
    %37 = vector.shape_cast %36 : vector<2x16x384xf32> to vector<32x384xf32>
    %c0_12 = arith.constant 0 : index
    %c0_13 = arith.constant 0 : index
    %38 = vector.load %arg4[%c0_12, %c0_13] : memref<384x256xf32, #tpu.memory_space<vmem>>, vector<384x256xf32>
    %cst_14 = arith.constant dense<0.000000e+00> : vector<32x256xf32>
    %39 = tpu.matmul %32, %38, %cst_14 {dimension_numbers = #tpu.dot_dimension_numbers<[1], [0], [0], [1], [0, 0, 1, 1], [], []>} : vector<32x384xf32>, vector<384x256xf32>, vector<32x256xf32> -> vector<32x256xf32>
    %c0_15 = arith.constant 0 : index
    %c0_16 = arith.constant 0 : index
    %40 = vector.load %arg4[%c0_15, %c0_16] : memref<384x256xf32, #tpu.memory_space<vmem>>, vector<384x256xf32>
    %cst_17 = arith.constant dense<0.000000e+00> : vector<32x256xf32>
    %41 = tpu.matmul %37, %40, %cst_17 {dimension_numbers = #tpu.dot_dimension_numbers<[1], [0], [0], [1], [0, 0, 1, 1], [], []>} : vector<32x384xf32>, vector<384x256xf32>, vector<32x256xf32> -> vector<32x256xf32>
    %cst_18 = arith.constant dense<0.000000e+00> : vector<256xf32>
    %42 = vector.multi_reduction <add>, %39, %cst_18 [0] : vector<32x256xf32> to vector<256xf32>
    %43 = vector.shape_cast %42 : vector<256xf32> to vector<1x256xf32>
    %cst_19 = arith.constant dense<0.000000e+00> : vector<256xf32>
    %44 = vector.multi_reduction <add>, %41, %cst_19 [0] : vector<32x256xf32> to vector<256xf32>
    %45 = vector.shape_cast %44 : vector<256xf32> to vector<1x256xf32>
    %46 = arith.addf %43, %45 : vector<1x256xf32>
    %47 = arith.mulf %39, %39 : vector<32x256xf32>
    %cst_20 = arith.constant dense<0.000000e+00> : vector<256xf32>
    %48 = vector.multi_reduction <add>, %47, %cst_20 [0] : vector<32x256xf32> to vector<256xf32>
    %49 = vector.shape_cast %48 : vector<256xf32> to vector<1x256xf32>
    %50 = arith.mulf %41, %41 : vector<32x256xf32>
    %cst_21 = arith.constant dense<0.000000e+00> : vector<256xf32>
    %51 = vector.multi_reduction <add>, %50, %cst_21 [0] : vector<32x256xf32> to vector<256xf32>
    %52 = vector.shape_cast %51 : vector<256xf32> to vector<1x256xf32>
    %53 = arith.addf %49, %52 : vector<1x256xf32>
    %54 = tpu.concatenate %46, %53 in 0 : vector<1x256xf32>, vector<1x256xf32> -> vector<2x256xf32>
    %c0_22 = arith.constant 0 : index
    %c0_23 = arith.constant 0 : index
    %55 = vector.load %arg5[%c0_22, %c0_23] : memref<256x8xf32, #tpu.memory_space<vmem>>, vector<256x8xf32>
    %cst_24 = arith.constant dense<0.000000e+00> : vector<2x8xf32>
    %56 = tpu.matmul %54, %55, %cst_24 {dimension_numbers = #tpu.dot_dimension_numbers<[1], [0], [0], [1], [0, 0, 1, 1], [], []>} : vector<2x256xf32>, vector<256x8xf32>, vector<2x8xf32> -> vector<2x8xf32>
    %57 = vector.extract_strided_slice %56 {offsets = [0, 0], sizes = [1, 8], strides = [1, 1]} : vector<2x8xf32> to vector<1x8xf32>
    %cst_25 = arith.constant 2.048000e+03 : f32
    %58 = vector.broadcast %cst_25 : f32 to vector<1x8xf32>
    %59 = arith.divf %57, %58 : vector<1x8xf32>
    %60 = vector.extract_strided_slice %56 {offsets = [1, 0], sizes = [1, 8], strides = [1, 1]} : vector<2x8xf32> to vector<1x8xf32>
    %cst_26 = arith.constant 2.048000e+03 : f32
    %61 = vector.broadcast %cst_26 : f32 to vector<1x8xf32>
    %62 = arith.divf %60, %61 : vector<1x8xf32>
    %63 = arith.mulf %59, %59 : vector<1x8xf32>
    %64 = arith.subf %62, %63 : vector<1x8xf32>
    %cst_27 = arith.constant 0.000000e+00 : f32
    %65 = vector.broadcast %cst_27 : f32 to vector<1x8xf32>
    %66 = arith.maximumf %64, %65 : vector<1x8xf32>
    %67 = tpu.concatenate %59, %66 in 0 : vector<1x8xf32>, vector<1x8xf32> -> vector<2x8xf32>
    %c0_28 = arith.constant 0 : index
    %c0_29 = arith.constant 0 : index
    %68 = vector.load %arg6[%c0_28, %c0_29] : memref<8x256xf32, #tpu.memory_space<vmem>>, vector<8x256xf32>
    %cst_30 = arith.constant dense<0.000000e+00> : vector<2x256xf32>
    %69 = tpu.matmul %67, %68, %cst_30 {dimension_numbers = #tpu.dot_dimension_numbers<[1], [0], [0], [1], [0, 0, 1, 1], [], []>} : vector<2x8xf32>, vector<8x256xf32>, vector<2x256xf32> -> vector<2x256xf32>
    %c0_31 = arith.constant 0 : index
    %c0_32 = arith.constant 0 : index
    %70 = vector.load %arg7[%c0_31, %c0_32] : memref<1x256xf32, #tpu.memory_space<vmem>>, vector<1x256xf32>
    %71 = vector.extract_strided_slice %69 {offsets = [1, 0], sizes = [1, 256], strides = [1, 1]} : vector<2x256xf32> to vector<1x256xf32>
    %cst_33 = arith.constant 9.99999974E-6 : f32
    %72 = vector.broadcast %cst_33 : f32 to vector<1x256xf32>
    %73 = arith.addf %71, %72 : vector<1x256xf32>
    %74 = math.rsqrt %73 : vector<1x256xf32>
    %75 = arith.mulf %70, %74 : vector<1x256xf32>
    %c0_34 = arith.constant 0 : index
    %c0_35 = arith.constant 0 : index
    %76 = vector.load %arg8[%c0_34, %c0_35] : memref<1x256xf32, #tpu.memory_space<vmem>>, vector<1x256xf32>
    %77 = vector.extract_strided_slice %69 {offsets = [0, 0], sizes = [1, 256], strides = [1, 1]} : vector<2x256xf32> to vector<1x256xf32>
    %78 = arith.mulf %77, %75 : vector<1x256xf32>
    %79 = arith.subf %76, %78 : vector<1x256xf32>
    %80 = vector.broadcast %75 : vector<1x256xf32> to vector<32x256xf32>
    %81 = arith.mulf %39, %80 : vector<32x256xf32>
    %82 = vector.broadcast %79 : vector<1x256xf32> to vector<32x256xf32>
    %83 = arith.addf %81, %82 : vector<32x256xf32>
    %84 = vector.broadcast %75 : vector<1x256xf32> to vector<32x256xf32>
    %85 = arith.mulf %41, %84 : vector<32x256xf32>
    %86 = vector.broadcast %79 : vector<1x256xf32> to vector<32x256xf32>
    %87 = arith.addf %85, %86 : vector<32x256xf32>
    %cst_36 = arith.constant 0.000000e+00 : f32
    %88 = vector.broadcast %cst_36 : f32 to vector<32x256xf32>
    %89 = arith.cmpf ogt, %83, %88 : vector<32x256xf32>
    %90 = vector.broadcast %0 : f32 to vector<32x256xf32>
    %91 = arith.mulf %90, %83 : vector<32x256xf32>
    %92 = arith.select %89, %83, %91 : vector<32x256xi1>, vector<32x256xf32>
    %cst_37 = arith.constant 0.000000e+00 : f32
    %93 = vector.broadcast %cst_37 : f32 to vector<32x256xf32>
    %94 = arith.cmpf ogt, %87, %93 : vector<32x256xf32>
    %95 = vector.broadcast %0 : f32 to vector<32x256xf32>
    %96 = arith.mulf %95, %87 : vector<32x256xf32>
    %97 = arith.select %94, %87, %96 : vector<32x256xi1>, vector<32x256xf32>
    %98 = vector.shape_cast %92 : vector<32x256xf32> to vector<2x16x256xf32>
    %c0_38 = arith.constant 0 : index
    %c0_39 = arith.constant 0 : index
    %c0_40 = arith.constant 0 : index
    %99 = vector.load %arg10[%c0_38, %c0_39, %c0_40] : memref<2x16x512xf32, #tpu.memory_space<vmem>>, vector<2x16x256xf32>
    tpu.vector_store %arg10[%c0_38, %c0_39, %c0_40], %98 {strides = array<i32>} : memref<2x16x512xf32, #tpu.memory_space<vmem>>, vector<2x16x256xf32>,
    %100 = vector.shape_cast %97 : vector<32x256xf32> to vector<2x16x256xf32>
    %c0_41 = arith.constant 0 : index
    %c0_42 = arith.constant 0 : index
    %c256 = arith.constant 256 : index
    %101 = vector.load %arg10[%c0_41, %c0_42, %c256] : memref<2x16x512xf32, #tpu.memory_space<vmem>>, vector<2x16x256xf32>
    tpu.vector_store %arg10[%c0_41, %c0_42, %c256], %100 {strides = array<i32>} : memref<2x16x512xf32, #tpu.memory_space<vmem>>, vector<2x16x256xf32>,
    return
  }
  func.func @transform_0(%arg0: i32) -> (i32, i32, i32) {
    %c0_i32 = arith.constant 0 : i32
    %c0_i32_0 = arith.constant 0 : i32
    %c0_i32_1 = arith.constant 0 : i32
    %c0_i32_2 = arith.constant 0 : i32
    return %c0_i32, %c0_i32_0, %c0_i32_1 : i32, i32, i32
  }
  func.func @transform_1(%arg0: i32) -> (i32, i32) {
    %c0_i32 = arith.constant 0 : i32
    %c0_i32_0 = arith.constant 0 : i32
    %c0_i32_1 = arith.constant 0 : i32
    return %c0_i32, %c0_i32_0 : i32, i32
  }
  func.func @transform_2(%arg0: i32) -> (i32, i32) {
    %c0_i32 = arith.constant 0 : i32
    %c0_i32_0 = arith.constant 0 : i32
    %c0_i32_1 = arith.constant 0 : i32
    return %c0_i32, %c0_i32_0 : i32, i32
  }
  func.func @transform_3(%arg0: i32) -> (i32, i32) {
    %c0_i32 = arith.constant 0 : i32
    %c0_i32_0 = arith.constant 0 : i32
    %c0_i32_1 = arith.constant 0 : i32
    return %c0_i32, %c0_i32_0 : i32, i32
  }
  func.func @transform_4(%arg0: i32) -> (i32, i32) {
    %c0_i32 = arith.constant 0 : i32
    %c0_i32_0 = arith.constant 0 : i32
    %c0_i32_1 = arith.constant 0 : i32
    return %c0_i32, %c0_i32_0 : i32, i32
  }
  func.func @transform_5(%arg0: i32) -> (i32, i32) {
    %c0_i32 = arith.constant 0 : i32
    %c0_i32_0 = arith.constant 0 : i32
    %c0_i32_1 = arith.constant 0 : i32
    return %c0_i32, %c0_i32_0 : i32, i32
  }
  func.func @transform_6(%arg0: i32) -> (i32, i32) {
    %c0_i32 = arith.constant 0 : i32
    %c0_i32_0 = arith.constant 0 : i32
    %c0_i32_1 = arith.constant 0 : i32
    return %c0_i32, %c0_i32_0 : i32, i32
  }
  func.func @transform_7(%arg0: i32) -> (i32, i32) {
    %c0_i32 = arith.constant 0 : i32
    %c0_i32_0 = arith.constant 0 : i32
    %c0_i32_1 = arith.constant 0 : i32
    return %c0_i32, %c0_i32_0 : i32, i32
  }
  func.func @transform_8(%arg0: i32) -> i32 {
    %c0_i32 = arith.constant 0 : i32
    %c0_i32_0 = arith.constant 0 : i32
    return %c0_i32 : i32
  }
  func.func @transform_9(%arg0: i32) -> (i32, i32, i32) {
    %c0_i32 = arith.constant 0 : i32
    %c0_i32_0 = arith.constant 0 : i32
    %c0_i32_1 = arith.constant 0 : i32
    %c0_i32_2 = arith.constant 0 : i32
    return %c0_i32, %c0_i32_0, %c0_i32_1 : i32, i32, i32
  }
}

</mosaic_0001>

<llo_original>
// kernel: tpu_custom_call.1
$region0: #{tpu_custom_call.1}
  #allocation0 [shape = 'u32[]', space=smem, size = 0x4, offset = 0x4, fixed_abs, tag = 'smem constant byte address 0x4 - core index']
  #allocation1 [shape = 'u32[144,128]{1,0:T(1,128)}', space=vmem, size = 0x12000, scoped, tag = 'internal scratch']
  #allocation2 [shape = 'f32[1]{0:T(128)S(6)}', space=smem, size = 0x200, scoped, tag = 'scoped memory for tpu_custom_call.1']
  %s0 = inlined_call_operand.vmem [shape: f32[2,16,64], index: 0, kind: input, shape index: {}]
  %s1 = inlined_call_operand.vmem [shape: f32[192,128], index: 1, kind: input, shape index: {}]
  %s2 = inlined_call_operand.hbm [shape: f32[192,128], index: 2, kind: input, shape index: {}]
  %s3 = inlined_call_operand.hbm [shape: f32[384,256], index: 3, kind: input, shape index: {}]
  %s4 = inlined_call_operand.vmem [shape: f32[256,8], index: 4, kind: input, shape index: {}]
  %s5 = inlined_call_operand.vmem [shape: f32[8,256], index: 5, kind: input, shape index: {}]
  %s6 = inlined_call_operand.vmem [shape: f32[1,256], index: 6, kind: input, shape index: {}]
  %s7 = inlined_call_operand.vmem [shape: f32[1,256], index: 7, kind: input, shape index: {}]
  %s8 = inlined_call_operand.<no memory space> [shape: f32[1], index: 8, kind: input, shape index: {}]
  %s9 = inlined_call_operand.hbm [shape: f32[2,16,512], index: 9, kind: output, shape index: {}]
  %s10 = sld [smem:[#allocation0]]
  $region54: #{tpu_custom_call.1} parent=0
    _
  %s12 = ssub.s32 1, %s10
  %s13 = scalar_select 0, %s12, %s10
  %14 = sst [smem:[#allocation2]] %s8
  $region1: #{tpu_custom_call.1} parent=0
    #allocation3 [shape = 'u8[98304]{0}', space=vmem, size = 0x18000, scoped, tag = 'input window, operand 2, single buffered']
    #allocation4 [shape = 's32[1]{0}', space=sflag, size = 0x4, scoped, tag = 'scoped memory for tpu_custom_call.1']
    #allocation5 [shape = 's32[1]{0}', space=sflag, size = 0x4, scoped, tag = 'scoped memory for tpu_custom_call.1']
    #allocation6 [shape = 'u8[393216]{0}', space=vmem, size = 0x60000, scoped, tag = 'input window, operand 3, single buffered']
    #allocation7 [shape = 's32[1]{0}', space=sflag, size = 0x4, scoped, tag = 'scoped memory for tpu_custom_call.1']
    #allocation8 [shape = 'u8[65536]{0}', space=vmem, size = 0x10000, scoped, tag = 'output window, operand 0, single buffered']
    %15 = vsyncpa [#allocation4], 0
    %16 = vsyncpa [#allocation7], 0
    %17 = vsyncpa [#allocation5], 0
    // Predicated region
    $region2: #{tpu_custom_call.1} parent=1 // pred_check
      _
    $region3: #{tpu_custom_call.1} parent=1 // pred_check_branch
      %19 = sbr.rel (0) target = $region5
    $region4: #{tpu_custom_call.1} parent=1 // pred_region
      _
    $region5: #{tpu_custom_call.1} parent=1 // pred_fallthru
      _
    // Predicated region
    $region6: #{tpu_custom_call.1} parent=1 // pred_check
      _
    $region7: #{tpu_custom_call.1} parent=1 // pred_check_branch
      %21 = sbr.rel (0) target = $region9
    $region8: #{tpu_custom_call.1} parent=1 // pred_region
      _
    $region9: #{tpu_custom_call.1} parent=1 // pred_fallthru
      _
    // Predicated region
    $region10: #{tpu_custom_call.1} parent=1 // pred_check
      _
    $region11: #{tpu_custom_call.1} parent=1 // pred_check_branch
      %23 = sbr.rel (0) target = $region13
    $region12: #{tpu_custom_call.1} parent=1 // pred_region
      %s25 = ssub.s32 3072, 3072
      %26 = vsyncadd [#allocation4], %s25
      %s27 = sshll.u32 [#allocation3], 4
      %s28 = int_to_ptr.vmem [resolvable:$true] %s27
      %33 = dma.hbm_to_vmem [thread:$0]  %s2, 3072, %s28, [#allocation4], 128, 128, 8
    $region13: #{tpu_custom_call.1} parent=1 // pred_fallthru
      _
    // Predicated region
    $region14: #{tpu_custom_call.1} parent=1 // pred_check
      _
    $region15: #{tpu_custom_call.1} parent=1 // pred_check_branch
      %35 = sbr.rel (0) target = $region17
    $region16: #{tpu_custom_call.1} parent=1 // pred_region
      %s37 = ssub.s32 12288, 12288
      %38 = vsyncadd [#allocation7], %s37
      %s39 = sshll.u32 [#allocation6], 4
      %s40 = int_to_ptr.vmem [resolvable:$true] %s39
      %45 = dma.hbm_to_vmem [thread:$0]  %s3, 12288, %s40, [#allocation7], 256, 256, 16
    $region17: #{tpu_custom_call.1} parent=1 // pred_fallthru
      _
    // Predicated region
    $region18: #{tpu_custom_call.1} parent=1 // pred_check
      _
    $region19: #{tpu_custom_call.1} parent=1 // pred_check_branch
      %47 = sbr.rel (0) target = $region21
    $region20: #{tpu_custom_call.1} parent=1 // pred_region
      _
    $region21: #{tpu_custom_call.1} parent=1 // pred_fallthru
      _
    // Predicated region
    $region22: #{tpu_custom_call.1} parent=1 // pred_check
      _
    $region23: #{tpu_custom_call.1} parent=1 // pred_check_branch
      %49 = sbr.rel (0) target = $region25
    $region24: #{tpu_custom_call.1} parent=1 // pred_region
      _
    $region25: #{tpu_custom_call.1} parent=1 // pred_fallthru
      _
    // Predicated region
    $region26: #{tpu_custom_call.1} parent=1 // pred_check
      _
    $region27: #{tpu_custom_call.1} parent=1 // pred_check_branch
      %51 = sbr.rel (0) target = $region29
    $region28: #{tpu_custom_call.1} parent=1 // pred_region
      _
    $region29: #{tpu_custom_call.1} parent=1 // pred_fallthru
      _
    // Predicated region
    $region30: #{tpu_custom_call.1} parent=1 // pred_check
      _
    $region31: #{tpu_custom_call.1} parent=1 // pred_check_branch
      %53 = sbr.rel (0) target = $region33
    $region32: #{tpu_custom_call.1} parent=1 // pred_region
      _
    $region33: #{tpu_custom_call.1} parent=1 // pred_fallthru
      _
    // Predicated region
    $region34: #{tpu_custom_call.1} parent=1 // pred_check
      _
    $region35: #{tpu_custom_call.1} parent=1 // pred_check_branch
      %55 = sbr.rel (0) target = $region37
    $region36: #{tpu_custom_call.1} parent=1 // pred_region
      _
    $region37: #{tpu_custom_call.1} parent=1 // pred_fallthru
      _
    // Predicated region
    $region38: #{tpu_custom_call.1} parent=1 // pred_check
      _
    $region39: #{tpu_custom_call.1} parent=1 // pred_check_branch
      %57 = sbr.rel (0) target = $region41
    $region40: #{tpu_custom_call.1} parent=1 // pred_region
      %58 = dma.done [#allocation4], 3072
    $region41: #{tpu_custom_call.1} parent=1 // pred_fallthru
      _
    // Predicated region
    $region42: #{tpu_custom_call.1} parent=1 // pred_check
      _
    $region43: #{tpu_custom_call.1} parent=1 // pred_check_branch
      %60 = sbr.rel (0) target = $region45
    $region44: #{tpu_custom_call.1} parent=1 // pred_region
      %61 = dma.done [#allocation7], 12288
    $region45: #{tpu_custom_call.1} parent=1 // pred_fallthru
      _
    %s62 = sld [smem:[#allocation2]]
    %v63 = vld [vmem:[%s0] sm:$0xff]
    %v64 = vld [vmem:[%s0 + $0x8] sm:$0xff]
    %v65 = vld [vmem:[%s0 + $0x10] sm:$0xff]
    %v66 = vld [vmem:[%s0 + $0x18] sm:$0xff]
    %vm71 = vcmask 1040384
    %v72 = vrot.slane %v63, 7
    %v73 = vrot.slane %v64, 7
    %v74 = vsel %vm71, %v72, %v73
    %v75 = vrot.slane %v65, 7
    %v76 = vrot.slane %v66, 7
    %v77 = vsel %vm71, %v75, %v76
    %v84 = vsel %vm71, 0.0, %v72
    %v85 = vsel %vm71, 0.0, %v75
    %v86 = vsel %vm71, %v73, 0.0
    %v87 = vsel %vm71, %v76, 0.0
    %vm92 = vcmask 1046528
    %v93 = vrot.slane %v84, 1
    %v94 = vrot.slane %v74, 1
    %v95 = vsel %vm92, %v93, %v94
    %v96 = vrot.slane %v86, 1
    %v97 = vsel %vm92, %v94, %v96
    %v98 = vrot.slane %v85, 1
    %v99 = vrot.slane %v77, 1
    %v100 = vsel %vm92, %v98, %v99
    %v101 = vrot.slane %v87, 1
    %v102 = vsel %vm92, %v99, %v101
    %103 = vrot.lane.b32.xlu0 %v95, 64
    %v104 = vpop.permute.xlu0 %103
    %105 = vrot.lane.b32.xlu0 %v97, 64
    %v106 = vpop.permute.xlu0 %105
    %107 = vrot.lane.b32.xlu0 %v100, 64
    %v108 = vpop.permute.xlu0 %107
    %109 = vrot.lane.b32.xlu0 %v102, 64
    %v110 = vpop.permute.xlu0 %109
    %vm115 = vcmask 1045504
    %v116 = vrot.slane %v84, 2
    %v117 = vrot.slane %v74, 2
    %v118 = vsel %vm115, %v116, %v117
    %v119 = vrot.slane %v86, 2
    %v120 = vsel %vm115, %v117, %v119
    %v121 = vrot.slane %v85, 2
    %v122 = vrot.slane %v77, 2
    %v123 = vsel %vm115, %v121, %v122
    %v124 = vrot.slane %v87, 2
    %v125 = vsel %vm115, %v122, %v124
    %vm126 = vcmask 523264
    %v127 = vsel %vm126, %v84, %v104
    %v128 = vsel %vm126, %v74, %v106
    %v129 = vsel %vm126, %v85, %v108
    %v130 = vsel %vm126, %v77, %v110
    %v131 = vld [vmem:[%s1] sm:$0xff]
    %v132 = vld [vmem:[%s1 + $0x8] sm:$0xff]
    %v133 = vld [vmem:[%s1 + $0x10] sm:$0xff]
    %v134 = vld [vmem:[%s1 + $0x18] sm:$0xff]
    %v135 = vld [vmem:[%s1 + $0x20] sm:$0xff]
    %v136 = vld [vmem:[%s1 + $0x28] sm:$0xff]
    %v137 = vld [vmem:[%s1 + $0x30] sm:$0xff]
    %v138 = vld [vmem:[%s1 + $0x38] sm:$0xff]
    %v139 = vld [vmem:[%s1 + $0x40] sm:$0xff]
    %v140 = vld [vmem:[%s1 + $0x48] sm:$0xff]
    %v141 = vld [vmem:[%s1 + $0x50] sm:$0xff]
    %v142 = vld [vmem:[%s1 + $0x58] sm:$0xff]
    %v143 = vld [vmem:[%s1 + $0x60] sm:$0xff]
    %v144 = vld [vmem:[%s1 + $0x68] sm:$0xff]
    %v145 = vld [vmem:[%s1 + $0x70] sm:$0xff]
    %v146 = vld [vmem:[%s1 + $0x78] sm:$0xff]
    %v147 = vld [vmem:[%s1 + $0x80] sm:$0xff]
    %v148 = vld [vmem:[%s1 + $0x88] sm:$0xff]
    %v149 = vld [vmem:[%s1 + $0x90] sm:$0xff]
    %v150 = vld [vmem:[%s1 + $0x98] sm:$0xff]
    %v151 = vld [vmem:[%s1 + $0xa0] sm:$0xff]
    %v152 = vld [vmem:[%s1 + $0xa8] sm:$0xff]
    %v153 = vld [vmem:[%s1 + $0xb0] sm:$0xff]
    %v154 = vld [vmem:[%s1 + $0xb8] sm:$0xff]
    %v155 = vsel %vm126, %v118, 0
    %v157 = vsel %vm126, %v120, 0
    %v159 = vsel %vm126, %v123, 0
    %v161 = vsel %vm126, %v125, 0
    %163 = vmatprep.subr.mxu0 0.0
    %164 = vmatpush1.msra.mxu0 %v131
    %165 = vmatprep.subr.mxu0 0.0
    %166 = vmatpush1.msra.mxu0 %v132
    %167 = vmatprep.subr.mxu0 0.0
    %168 = vmatpush1.msra.mxu0 %v133
    %169 = vmatprep.subr.mxu0 0.0
    %170 = vmatpush1.msra.mxu0 %v134
    %171 = vmatprep.subr.mxu0 0.0
    %172 = vmatpush1.msra.mxu0 %v135
    %173 = vmatprep.subr.mxu0 0.0
    %174 = vmatpush1.msra.mxu0 %v136
    %175 = vmatprep.subr.mxu0 0.0
    %176 = vmatpush1.msra.mxu0 %v137
    %177 = vmatprep.subr.mxu0 0.0
    %178 = vmatpush1.msra.mxu0 %v138
    %179 = vmatprep.subr.mxu0 0.0
    %180 = vmatpush1.msra.mxu0 %v139
    %181 = vmatprep.subr.mxu0 0.0
    %182 = vmatpush1.msra.mxu0 %v140
    %183 = vmatprep.subr.mxu0 0.0
    %184 = vmatpush1.msra.mxu0 %v141
    %185 = vmatprep.subr.mxu0 0.0
    %186 = vmatpush1.msra.mxu0 %v142
    %187 = vmatprep.subr.mxu0 0.0
    %188 = vmatpush1.msra.mxu0 %v143
    %189 = vmatprep.subr.mxu0 0.0
    %190 = vmatpush1.msra.mxu0 %v144
    %191 = vmatprep.subr.mxu0 0.0
    %192 = vmatpush1.msra.mxu0 %v145
    %193 = vmatprep.subr.mxu0 0.0
    %194 = vmatpush1.msra.mxu0 %v146
    %195 = vmatprep.subr.mxu0 0.0
    %196 = vmatpush1.msra.mxu0 %v147
    %197 = vmatprep.subr.mxu0 0.0
    %198 = vmatpush1.msra.mxu0 %v148
    %199 = vmatprep.subr.mxu0 0.0
    %200 = vmatpush1.msra.mxu0 %v149
    %201 = vmatprep.subr.mxu0 0.0
    %202 = vmatpush1.msra.mxu0 %v150
    %203 = vmatprep.subr.mxu0 0.0
    %204 = vmatpush1.msra.mxu0 %v151
    %205 = vmatprep.subr.mxu0 0.0
    %206 = vmatpush1.msra.mxu0 %v152
    %207 = vmatprep.subr.mxu0 0.0
    %208 = vmatpush1.msra.mxu0 %v153
    %209 = vmatprep.subr.mxu0 0.0
    %210 = vmatpush1.msra.mxu0 %v154
    %211 = vmatprep.subr.mxu0 0.0
    %212 = vmatpush1.msra.mxu0 0.0
    %213 = vmatprep.subr.mxu0 0.0
    %214 = vmatpush1.msra.mxu0 0.0
    %215 = vmatprep.subr.mxu0 0.0
    %216 = vmatpush1.msra.mxu0 0.0
    %217 = vmatprep.subr.mxu0 0.0
    %218 = vmatpush1.msra.mxu0 0.0
    %219 = vmatprep.subr.mxu0 0.0
    %220 = vmatpush1.msra.mxu0 0.0
    %221 = vmatprep.subr.mxu0 0.0
    %222 = vmatpush1.msra.mxu0 0.0
    %223 = vmatprep.subr.mxu0 0.0
    %224 = vmatpush1.msra.mxu0 0.0
    %225 = vmatprep.subr.mxu0 0.0
    %226 = vmatpush1.msra.mxu0 0.0
    %227 = vmatprep.mubr.f32.mxu0 %v155
    %228 = vmatmul.mubr.f32.gmra.mrb[0].mxu0 %v127
    %v229 = vpop.f32.mrb[0].mxu0
    %v230 = vadd.f32 0.0, %v229
    %v231 = vpop.f32.mrb[0].mxu0
    %232 = vmatprep.mubr.f32.mxu0 %v157
    %233 = vmatmul.mubr.f32.gmra.mrb[0].mxu0 %v128
    %v234 = vpop.f32.mrb[0].mxu0
    %v235 = vadd.f32 0.0, %v234
    %v236 = vpop.f32.mrb[0].mxu0
    %237 = vmatprep.mubr.f32.mxu0 %v159
    %238 = vmatmul.mubr.f32.gmra.mrb[0].mxu0 %v129
    %v239 = vpop.f32.mrb[0].mxu0
    %v240 = vadd.f32 0.0, %v239
    %v241 = vpop.f32.mrb[0].mxu0
    %242 = vmatprep.mubr.f32.mxu0 %v161
    %243 = vmatmul.mubr.f32.gmra.mrb[0].mxu0 %v130
    %v244 = vpop.f32.mrb[0].mxu0
    %v245 = vadd.f32 0.0, %v244
    %v246 = vpop.f32.mrb[0].mxu0
    %247 = vdwg.mxu0
    %v248 = vld [vmem:[#allocation3] sm:$0xff]
    %v249 = vld [vmem:[#allocation3 + $0x8] sm:$0xff]
    %v250 = vld [vmem:[#allocation3 + $0x10] sm:$0xff]
    %v251 = vld [vmem:[#allocation3 + $0x18] sm:$0xff]
    %v252 = vld [vmem:[#allocation3 + $0x20] sm:$0xff]
    %v253 = vld [vmem:[#allocation3 + $0x28] sm:$0xff]
    %v254 = vld [vmem:[#allocation3 + $0x30] sm:$0xff]
    %v255 = vld [vmem:[#allocation3 + $0x38] sm:$0xff]
    %v256 = vld [vmem:[#allocation3 + $0x40] sm:$0xff]
    %v257 = vld [vmem:[#allocation3 + $0x48] sm:$0xff]
    %v258 = vld [vmem:[#allocation3 + $0x50] sm:$0xff]
    %v259 = vld [vmem:[#allocation3 + $0x58] sm:$0xff]
    %v260 = vld [vmem:[#allocation3 + $0x60] sm:$0xff]
    %v261 = vld [vmem:[#allocation3 + $0x68] sm:$0xff]
    %v262 = vld [vmem:[#allocation3 + $0x70] sm:$0xff]
    %v263 = vld [vmem:[#allocation3 + $0x78] sm:$0xff]
    %v264 = vld [vmem:[#allocation3 + $0x80] sm:$0xff]
    %v265 = vld [vmem:[#allocation3 + $0x88] sm:$0xff]
    %v266 = vld [vmem:[#allocation3 + $0x90] sm:$0xff]
    %v267 = vld [vmem:[#allocation3 + $0x98] sm:$0xff]
    %v268 = vld [vmem:[#allocation3 + $0xa0] sm:$0xff]
    %v269 = vld [vmem:[#allocation3 + $0xa8] sm:$0xff]
    %v270 = vld [vmem:[#allocation3 + $0xb0] sm:$0xff]
    %v271 = vld [vmem:[#allocation3 + $0xb8] sm:$0xff]
    %272 = vmatprep.subr.mxu0 0.0
    %273 = vmatpush1.msra.mxu0 %v248
    %274 = vmatprep.subr.mxu0 0.0
    %275 = vmatpush1.msra.mxu0 %v249
    %276 = vmatprep.subr.mxu0 0.0
    %277 = vmatpush1.msra.mxu0 %v250
    %278 = vmatprep.subr.mxu0 0.0
    %279 = vmatpush1.msra.mxu0 %v251
    %280 = vmatprep.subr.mxu0 0.0
    %281 = vmatpush1.msra.mxu0 %v252
    %282 = vmatprep.subr.mxu0 0.0
    %283 = vmatpush1.msra.mxu0 %v253
    %284 = vmatprep.subr.mxu0 0.0
    %285 = vmatpush1.msra.mxu0 %v254
    %286 = vmatprep.subr.mxu0 0.0
    %287 = vmatpush1.msra.mxu0 %v255
    %288 = vmatprep.subr.mxu0 0.0
    %289 = vmatpush1.msra.mxu0 %v256
    %290 = vmatprep.subr.mxu0 0.0
    %291 = vmatpush1.msra.mxu0 %v257
    %292 = vmatprep.subr.mxu0 0.0
    %293 = vmatpush1.msra.mxu0 %v258
    %294 = vmatprep.subr.mxu0 0.0
    %295 = vmatpush1.msra.mxu0 %v259
    %296 = vmatprep.subr.mxu0 0.0
    %297 = vmatpush1.msra.mxu0 %v260
    %298 = vmatprep.subr.mxu0 0.0
    %299 = vmatpush1.msra.mxu0 %v261
    %300 = vmatprep.subr.mxu0 0.0
    %301 = vmatpush1.msra.mxu0 %v262
    %302 = vmatprep.subr.mxu0 0.0
    %303 = vmatpush1.msra.mxu0 %v263
    %304 = vmatprep.subr.mxu0 0.0
    %305 = vmatpush1.msra.mxu0 %v264
    %306 = vmatprep.subr.mxu0 0.0
    %307 = vmatpush1.msra.mxu0 %v265
    %308 = vmatprep.subr.mxu0 0.0
    %309 = vmatpush1.msra.mxu0 %v266
    %310 = vmatprep.subr.mxu0 0.0
    %311 = vmatpush1.msra.mxu0 %v267
    %312 = vmatprep.subr.mxu0 0.0
    %313 = vmatpush1.msra.mxu0 %v268
    %314 = vmatprep.subr.mxu0 0.0
    %315 = vmatpush1.msra.mxu0 %v269
    %316 = vmatprep.subr.mxu0 0.0
    %317 = vmatpush1.msra.mxu0 %v270
    %318 = vmatprep.subr.mxu0 0.0
    %319 = vmatpush1.msra.mxu0 %v271
    %320 = vmatprep.subr.mxu0 0.0
    %321 = vmatpush1.msra.mxu0 0.0
    %322 = vmatprep.subr.mxu0 0.0
    %323 = vmatpush1.msra.mxu0 0.0
    %324 = vmatprep.subr.mxu0 0.0
    %325 = vmatpush1.msra.mxu0 0.0
    %326 = vmatprep.subr.mxu0 0.0
    %327 = vmatpush1.msra.mxu0 0.0
    %328 = vmatprep.subr.mxu0 0.0
    %329 = vmatpush1.msra.mxu0 0.0
    %330 = vmatprep.subr.mxu0 0.0
    %331 = vmatpush1.msra.mxu0 0.0
    %332 = vmatprep.subr.mxu0 0.0
    %333 = vmatpush1.msra.mxu0 0.0
    %334 = vmatprep.subr.mxu0 0.0
    %335 = vmatpush1.msra.mxu0 0.0
    %336 = vmatprep.mubr.f32.mxu0 %v155
    %337 = vmatmul.mubr.f32.gmra.mrb[0].mxu0 %v127
    %v338 = vpop.f32.mrb[0].mxu0
    %v339 = vadd.f32 0.0, %v338
    %v340 = vpop.f32.mrb[0].mxu0
    %341 = vmatprep.mubr.f32.mxu0 %v157
    %342 = vmatmul.mubr.f32.gmra.mrb[0].mxu0 %v128
    %v343 = vpop.f32.mrb[0].mxu0
    %v344 = vadd.f32 0.0, %v343
    %v345 = vpop.f32.mrb[0].mxu0
    %346 = vmatprep.mubr.f32.mxu0 %v159
    %347 = vmatmul.mubr.f32.gmra.mrb[0].mxu0 %v129
    %v348 = vpop.f32.mrb[0].mxu0
    %v349 = vadd.f32 0.0, %v348
    %v350 = vpop.f32.mrb[0].mxu0
    %351 = vmatprep.mubr.f32.mxu0 %v161
    %352 = vmatmul.mubr.f32.gmra.mrb[0].mxu0 %v130
    %v353 = vpop.f32.mrb[0].mxu0
    %v354 = vadd.f32 0.0, %v353
    %v355 = vpop.f32.mrb[0].mxu0
    %356 = vdwg.mxu0
    %vm357 = vcmp.gt.f32.partialorder %v230, 0.0
    %vm358 = vcmp.gt.f32.partialorder %v235, 0.0
    %vm359 = vcmp.gt.f32.partialorder %v240, 0.0
    %vm360 = vcmp.gt.f32.partialorder %v245, 0.0
    %v361 = vstv %s62
    %v362 = vmul.f32 %v361, %v230
    %v363 = vmul.f32 %v361, %v235
    %v364 = vmul.f32 %v361, %v240
    %v365 = vmul.f32 %v361, %v245
    %v366 = vsel %vm357, %v230, %v362
    %v367 = vsel %vm358, %v235, %v363
    %v368 = vsel %vm359, %v240, %v364
    %v369 = vsel %vm360, %v245, %v365
    %vm370 = vcmp.gt.f32.partialorder %v339, 0.0
    %vm371 = vcmp.gt.f32.partialorder %v344, 0.0
    %vm372 = vcmp.gt.f32.partialorder %v349, 0.0
    %vm373 = vcmp.gt.f32.partialorder %v354, 0.0
    %v374 = vmul.f32 %v361, %v339
    %v375 = vmul.f32 %v361, %v344
    %v376 = vmul.f32 %v361, %v349
    %v377 = vmul.f32 %v361, %v354
    %v378 = vsel %vm370, %v339, %v374
    %v379 = vsel %vm371, %v344, %v375
    %v380 = vsel %vm372, %v349, %v376
    %v381 = vsel %vm373, %v354, %v377
    %v386 = vrot.slane %v366, 7
    %v387 = vrot.slane %v367, 7
    %v388 = vsel %vm71, %v386, %v387
    %v389 = vrot.slane %v368, 7
    %v390 = vrot.slane %v369, 7
    %v391 = vsel %vm71, %v389, %v390
    %v396 = vsel %vm71, 0.0, %v386
    %v397 = vsel %vm71, 0.0, %v389
    %v398 = vsel %vm71, %v387, 0.0
    %v399 = vsel %vm71, %v390, 0.0
    %v404 = vrot.slane %v378, 7
    %v405 = vrot.slane %v379, 7
    %v406 = vsel %vm71, %v404, %v405
    %v407 = vrot.slane %v380, 7
    %v408 = vrot.slane %v381, 7
    %v409 = vsel %vm71, %v407, %v408
    %v416 = vsel %vm71, 0.0, %v404
    %v417 = vsel %vm71, 0.0, %v407
    %v418 = vsel %vm71, %v405, 0.0
    %v419 = vsel %vm71, %v408, 0.0
    %v424 = vrot.slane %v396, 1
    %v425 = vrot.slane %v388, 1
    %v426 = vsel %vm92, %v424, %v425
    %v427 = vrot.slane %v398, 1
    %v428 = vsel %vm92, %v425, %v427
    %v429 = vrot.slane %v397, 1
    %v430 = vrot.slane %v391, 1
    %v431 = vsel %vm92, %v429, %v430
    %v432 = vrot.slane %v399, 1
    %v433 = vsel %vm92, %v430, %v432
    %v442 = vrot.slane %v416, 1
    %v443 = vrot.slane %v406, 1
    %v444 = vsel %vm92, %v442, %v443
    %v445 = vrot.slane %v418, 1
    %v446 = vsel %vm92, %v443, %v445
    %v447 = vrot.slane %v417, 1
    %v448 = vrot.slane %v409, 1
    %v449 = vsel %vm92, %v447, %v448
    %v450 = vrot.slane %v419, 1
    %v451 = vsel %vm92, %v448, %v450
    %v456 = vrot.slane %v426, 1
    %v457 = vrot.slane %v428, 1
    %v458 = vsel %vm92, %v456, %v457
    %v459 = vrot.slane %v427, 1
    %v460 = vsel %vm92, %v457, %v459
    %v461 = vrot.slane %v431, 1
    %v462 = vrot.slane %v433, 1
    %v463 = vsel %vm92, %v461, %v462
    %v464 = vrot.slane %v432, 1
    %v465 = vsel %vm92, %v462, %v464
    %v470 = vld [vmem:[#allocation6] sm:$0xff]
    %v471 = vld [vmem:[#allocation6 + $0x8] sm:$0xff]
    %v472 = vld [vmem:[#allocation6 + $0x10] sm:$0xff]
    %v473 = vld [vmem:[#allocation6 + $0x18] sm:$0xff]
    %v474 = vld [vmem:[#allocation6 + $0x20] sm:$0xff]
    %v475 = vld [vmem:[#allocation6 + $0x28] sm:$0xff]
    %v476 = vld [vmem:[#allocation6 + $0x30] sm:$0xff]
    %v477 = vld [vmem:[#allocation6 + $0x38] sm:$0xff]
    %v478 = vld [vmem:[#allocation6 + $0x40] sm:$0xff]
    %v479 = vld [vmem:[#allocation6 + $0x48] sm:$0xff]
    %v480 = vld [vmem:[#allocation6 + $0x50] sm:$0xff]
    %v481 = vld [vmem:[#allocation6 + $0x58] sm:$0xff]
    %v482 = vld [vmem:[#allocation6 + $0x60] sm:$0xff]
    %v483 = vld [vmem:[#allocation6 + $0x68] sm:$0xff]
    %v484 = vld [vmem:[#allocation6 + $0x70] sm:$0xff]
    %v485 = vld [vmem:[#allocation6 + $0x78] sm:$0xff]
    %v486 = vld [vmem:[#allocation6 + $0x80] sm:$0xff]
    %v487 = vld [vmem:[#allocation6 + $0x88] sm:$0xff]
    %v488 = vld [vmem:[#allocation6 + $0x90] sm:$0xff]
    %v489 = vld [vmem:[#allocation6 + $0x98] sm:$0xff]
    %v490 = vld [vmem:[#allocation6 + $0xa0] sm:$0xff]
    %v491 = vld [vmem:[#allocation6 + $0xa8] sm:$0xff]
    %v492 = vld [vmem:[#allocation6 + $0xb0] sm:$0xff]
    %v493 = vld [vmem:[#allocation6 + $0xb8] sm:$0xff]
    %v494 = vld [vmem:[#allocation6 + $0xc0] sm:$0xff]
    %v495 = vld [vmem:[#allocation6 + $0xc8] sm:$0xff]
    %v496 = vld [vmem:[#allocation6 + $0xd0] sm:$0xff]
    %v497 = vld [vmem:[#allocation6 + $0xd8] sm:$0xff]
    %v498 = vld [vmem:[#allocation6 + $0xe0] sm:$0xff]
    %v499 = vld [vmem:[#allocation6 + $0xe8] sm:$0xff]
    %v500 = vld [vmem:[#allocation6 + $0xf0] sm:$0xff]
    %v501 = vld [vmem:[#allocation6 + $0xf8] sm:$0xff]
    %v502 = vld [vmem:[#allocation6 + $0x100] sm:$0xff]
    %v503 = vld [vmem:[#allocation6 + $0x108] sm:$0xff]
    %v504 = vld [vmem:[#allocation6 + $0x110] sm:$0xff]
    %v505 = vld [vmem:[#allocation6 + $0x118] sm:$0xff]
    %v506 = vld [vmem:[#allocation6 + $0x120] sm:$0xff]
    %v507 = vld [vmem:[#allocation6 + $0x128] sm:$0xff]
    %v508 = vld [vmem:[#allocation6 + $0x130] sm:$0xff]
    %v509 = vld [vmem:[#allocation6 + $0x138] sm:$0xff]
    %v510 = vld [vmem:[#allocation6 + $0x140] sm:$0xff]
    %v511 = vld [vmem:[#allocation6 + $0x148] sm:$0xff]
    %v512 = vld [vmem:[#allocation6 + $0x150] sm:$0xff]
    %v513 = vld [vmem:[#allocation6 + $0x158] sm:$0xff]
    %v514 = vld [vmem:[#allocation6 + $0x160] sm:$0xff]
    %v515 = vld [vmem:[#allocation6 + $0x168] sm:$0xff]
    %v516 = vld [vmem:[#allocation6 + $0x170] sm:$0xff]
    %v517 = vld [vmem:[#allocation6 + $0x178] sm:$0xff]
    %v518 = vld [vmem:[#allocation6 + $0x180] sm:$0xff]
    %v519 = vld [vmem:[#allocation6 + $0x188] sm:$0xff]
    %v520 = vld [vmem:[#allocation6 + $0x190] sm:$0xff]
    %v521 = vld [vmem:[#allocation6 + $0x198] sm:$0xff]
    %v522 = vld [vmem:[#allocation6 + $0x1a0] sm:$0xff]
    %v523 = vld [vmem:[#allocation6 + $0x1a8] sm:$0xff]
    %v524 = vld [vmem:[#allocation6 + $0x1b0] sm:$0xff]
    %v525 = vld [vmem:[#allocation6 + $0x1b8] sm:$0xff]
    %v526 = vld [vmem:[#allocation6 + $0x1c0] sm:$0xff]
    %v527 = vld [vmem:[#allocation6 + $0x1c8] sm:$0xff]
    %v528 = vld [vmem:[#allocation6 + $0x1d0] sm:$0xff]
    %v529 = vld [vmem:[#allocation6 + $0x1d8] sm:$0xff]
    %v530 = vld [vmem:[#allocation6 + $0x1e0] sm:$0xff]
    %v531 = vld [vmem:[#allocation6 + $0x1e8] sm:$0xff]
    %v532 = vld [vmem:[#allocation6 + $0x1f0] sm:$0xff]
    %v533 = vld [vmem:[#allocation6 + $0x1f8] sm:$0xff]
    %v534 = vld [vmem:[#allocation6 + $0x200] sm:$0xff]
    %v535 = vld [vmem:[#allocation6 + $0x208] sm:$0xff]
    %v536 = vld [vmem:[#allocation6 + $0x210] sm:$0xff]
    %v537 = vld [vmem:[#allocation6 + $0x218] sm:$0xff]
    %v538 = vld [vmem:[#allocation6 + $0x220] sm:$0xff]
    %v539 = vld [vmem:[#allocation6 + $0x228] sm:$0xff]
    %v540 = vld [vmem:[#allocation6 + $0x230] sm:$0xff]
    %v541 = vld [vmem:[#allocation6 + $0x238] sm:$0xff]
    %v542 = vld [vmem:[#allocation6 + $0x240] sm:$0xff]
    %v543 = vld [vmem:[#allocation6 + $0x248] sm:$0xff]
    %v544 = vld [vmem:[#allocation6 + $0x250] sm:$0xff]
    %v545 = vld [vmem:[#allocation6 + $0x258] sm:$0xff]
    %v546 = vld [vmem:[#allocation6 + $0x260] sm:$0xff]
    %v547 = vld [vmem:[#allocation6 + $0x268] sm:$0xff]
    %v548 = vld [vmem:[#allocation6 + $0x270] sm:$0xff]
    %v549 = vld [vmem:[#allocation6 + $0x278] sm:$0xff]
    %v550 = vld [vmem:[#allocation6 + $0x280] sm:$0xff]
    %v551 = vld [vmem:[#allocation6 + $0x288] sm:$0xff]
    %v552 = vld [vmem:[#allocation6 + $0x290] sm:$0xff]
    %v553 = vld [vmem:[#allocation6 + $0x298] sm:$0xff]
    %v554 = vld [vmem:[#allocation6 + $0x2a0] sm:$0xff]
    %v555 = vld [vmem:[#allocation6 + $0x2a8] sm:$0xff]
    %v556 = vld [vmem:[#allocation6 + $0x2b0] sm:$0xff]
    %v557 = vld [vmem:[#allocation6 + $0x2b8] sm:$0xff]
    %v558 = vld [vmem:[#allocation6 + $0x2c0] sm:$0xff]
    %v559 = vld [vmem:[#allocation6 + $0x2c8] sm:$0xff]
    %v560 = vld [vmem:[#allocation6 + $0x2d0] sm:$0xff]
    %v561 = vld [vmem:[#allocation6 + $0x2d8] sm:$0xff]
    %v562 = vld [vmem:[#allocation6 + $0x2e0] sm:$0xff]
    %v563 = vld [vmem:[#allocation6 + $0x2e8] sm:$0xff]
    %v564 = vld [vmem:[#allocation6 + $0x2f0] sm:$0xff]
    %v565 = vld [vmem:[#allocation6 + $0x2f8] sm:$0xff]
    %566 = vmatprep.subr.mxu0 %v471
    %567 = vmatpush1.msra.mxu0 %v470
    %568 = vmatprep.subr.mxu0 %v473
    %569 = vmatpush1.msra.mxu0 %v472
    %570 = vmatprep.subr.mxu0 %v475
    %571 = vmatpush1.msra.mxu0 %v474
    %572 = vmatprep.subr.mxu0 %v477
    %573 = vmatpush1.msra.mxu0 %v476
    %574 = vmatprep.subr.mxu0 %v479
    %575 = vmatpush1.msra.mxu0 %v478
    %576 = vmatprep.subr.mxu0 %v481
    %577 = vmatpush1.msra.mxu0 %v480
    %578 = vmatprep.subr.mxu0 %v483
    %579 = vmatpush1.msra.mxu0 %v482
    %580 = vmatprep.subr.mxu0 %v485
    %581 = vmatpush1.msra.mxu0 %v484
    %582 = vmatprep.subr.mxu0 %v487
    %583 = vmatpush1.msra.mxu0 %v486
    %584 = vmatprep.subr.mxu0 %v489
    %585 = vmatpush1.msra.mxu0 %v488
    %586 = vmatprep.subr.mxu0 %v491
    %587 = vmatpush1.msra.mxu0 %v490
    %588 = vmatprep.subr.mxu0 %v493
    %589 = vmatpush1.msra.mxu0 %v492
    %590 = vmatprep.subr.mxu0 %v495
    %591 = vmatpush1.msra.mxu0 %v494
    %592 = vmatprep.subr.mxu0 %v497
    %593 = vmatpush1.msra.mxu0 %v496
    %594 = vmatprep.subr.mxu0 %v499
    %595 = vmatpush1.msra.mxu0 %v498
    %596 = vmatprep.subr.mxu0 %v501
    %597 = vmatpush1.msra.mxu0 %v500
    %598 = vmatprep.subr.mxu0 %v503
    %599 = vmatpush1.msra.mxu0 %v502
    %600 = vmatprep.subr.mxu0 %v505
    %601 = vmatpush1.msra.mxu0 %v504
    %602 = vmatprep.subr.mxu0 %v507
    %603 = vmatpush1.msra.mxu0 %v506
    %604 = vmatprep.subr.mxu0 %v509
    %605 = vmatpush1.msra.mxu0 %v508
    %606 = vmatprep.subr.mxu0 %v511
    %607 = vmatpush1.msra.mxu0 %v510
    %608 = vmatprep.subr.mxu0 %v513
    %609 = vmatpush1.msra.mxu0 %v512
    %610 = vmatprep.subr.mxu0 %v515
    %611 = vmatpush1.msra.mxu0 %v514
    %612 = vmatprep.subr.mxu0 %v517
    %613 = vmatpush1.msra.mxu0 %v516
    %614 = vmatprep.subr.mxu0 %v519
    %615 = vmatpush1.msra.mxu0 %v518
    %616 = vmatprep.subr.mxu0 %v521
    %617 = vmatpush1.msra.mxu0 %v520
    %618 = vmatprep.subr.mxu0 %v523
    %619 = vmatpush1.msra.mxu0 %v522
    %620 = vmatprep.subr.mxu0 %v525
    %621 = vmatpush1.msra.mxu0 %v524
    %622 = vmatprep.subr.mxu0 %v527
    %623 = vmatpush1.msra.mxu0 %v526
    %624 = vmatprep.subr.mxu0 %v529
    %625 = vmatpush1.msra.mxu0 %v528
    %626 = vmatprep.subr.mxu0 %v531
    %627 = vmatpush1.msra.mxu0 %v530
    %628 = vmatprep.subr.mxu0 %v533
    %629 = vmatpush1.msra.mxu0 %v532
    %630 = vmatprep.mubr.f32.mxu0 %v426
    %631 = vmatmul.mubr.f32.gmra.mrb[0].mxu0 %v416
    %v632 = vpop.f32.mrb[0].mxu0
    %v633 = vadd.f32 0.0, %v632
    %v634 = vpop.f32.mrb[0].mxu0
    %v635 = vadd.f32 0.0, %v634
    %636 = vmatprep.mubr.f32.mxu0 %v428
    %637 = vmatmul.mubr.f32.gmra.mrb[0].mxu0 %v406
    %v638 = vpop.f32.mrb[0].mxu0
    %v639 = vadd.f32 0.0, %v638
    %v640 = vpop.f32.mrb[0].mxu0
    %v641 = vadd.f32 0.0, %v640
    %642 = vmatprep.mubr.f32.mxu0 %v431
    %643 = vmatmul.mubr.f32.gmra.mrb[0].mxu0 %v417
    %v644 = vpop.f32.mrb[0].mxu0
    %v645 = vadd.f32 0.0, %v644
    %v646 = vpop.f32.mrb[0].mxu0
    %v647 = vadd.f32 0.0, %v646
    %648 = vmatprep.mubr.f32.mxu0 %v433
    %649 = vmatmul.mubr.f32.gmra.mrb[0].mxu0 %v409
    %v650 = vpop.f32.mrb[0].mxu0
    %v651 = vadd.f32 0.0, %v650
    %v652 = vpop.f32.mrb[0].mxu0
    %v653 = vadd.f32 0.0, %v652
    %654 = vdwg.mxu0
    %655 = vmatprep.subr.mxu0 %v535
    %656 = vmatpush1.msra.mxu0 %v534
    %657 = vmatprep.subr.mxu0 %v537
    %658 = vmatpush1.msra.mxu0 %v536
    %659 = vmatprep.subr.mxu0 %v539
    %660 = vmatpush1.msra.mxu0 %v538
    %661 = vmatprep.subr.mxu0 %v541
    %662 = vmatpush1.msra.mxu0 %v540
    %663 = vmatprep.subr.mxu0 %v543
    %664 = vmatpush1.msra.mxu0 %v542
    %665 = vmatprep.subr.mxu0 %v545
    %666 = vmatpush1.msra.mxu0 %v544
    %667 = vmatprep.subr.mxu0 %v547
    %668 = vmatpush1.msra.mxu0 %v546
    %669 = vmatprep.subr.mxu0 %v549
    %670 = vmatpush1.msra.mxu0 %v548
    %671 = vmatprep.subr.mxu0 %v551
    %672 = vmatpush1.msra.mxu0 %v550
    %673 = vmatprep.subr.mxu0 %v553
    %674 = vmatpush1.msra.mxu0 %v552
    %675 = vmatprep.subr.mxu0 %v555
    %676 = vmatpush1.msra.mxu0 %v554
    %677 = vmatprep.subr.mxu0 %v557
    %678 = vmatpush1.msra.mxu0 %v556
    %679 = vmatprep.subr.mxu0 %v559
    %680 = vmatpush1.msra.mxu0 %v558
    %681 = vmatprep.subr.mxu0 %v561
    %682 = vmatpush1.msra.mxu0 %v560
    %683 = vmatprep.subr.mxu0 %v563
    %684 = vmatpush1.msra.mxu0 %v562
    %685 = vmatprep.subr.mxu0 %v565
    %686 = vmatpush1.msra.mxu0 %v564
    %687 = vmatprep.subr.mxu0 0.0
    %688 = vmatpush1.msra.mxu0 0.0
    %689 = vmatprep.subr.mxu0 0.0
    %690 = vmatpush1.msra.mxu0 0.0
    %691 = vmatprep.subr.mxu0 0.0
    %692 = vmatpush1.msra.mxu0 0.0
    %693 = vmatprep.subr.mxu0 0.0
    %694 = vmatpush1.msra.mxu0 0.0
    %695 = vmatprep.subr.mxu0 0.0
    %696 = vmatpush1.msra.mxu0 0.0
    %697 = vmatprep.subr.mxu0 0.0
    %698 = vmatpush1.msra.mxu0 0.0
    %699 = vmatprep.subr.mxu0 0.0
    %700 = vmatpush1.msra.mxu0 0.0
    %701 = vmatprep.subr.mxu0 0.0
    %702 = vmatpush1.msra.mxu0 0.0
    %703 = vmatprep.subr.mxu0 0.0
    %704 = vmatpush1.msra.mxu0 0.0
    %705 = vmatprep.subr.mxu0 0.0
    %706 = vmatpush1.msra.mxu0 0.0
    %707 = vmatprep.subr.mxu0 0.0
    %708 = vmatpush1.msra.mxu0 0.0
    %709 = vmatprep.subr.mxu0 0.0
    %710 = vmatpush1.msra.mxu0 0.0
    %711 = vmatprep.subr.mxu0 0.0
    %712 = vmatpush1.msra.mxu0 0.0
    %713 = vmatprep.subr.mxu0 0.0
    %714 = vmatpush1.msra.mxu0 0.0
    %715 = vmatprep.subr.mxu0 0.0
    %716 = vmatpush1.msra.mxu0 0.0
    %717 = vmatprep.subr.mxu0 0.0
    %718 = vmatpush1.msra.mxu0 0.0
    %719 = vmatprep.mubr.f32.mxu0 0.0
    %720 = vmatmul.mubr.f32.gmra.mrb[0].mxu0 %v444
    %v721 = vpop.f32.mrb[0].mxu0
    %v722 = vadd.f32 %v633, %v721
    %v723 = vpop.f32.mrb[0].mxu0
    %v724 = vadd.f32 %v635, %v723
    %725 = vmatprep.mubr.f32.mxu0 0.0
    %726 = vmatmul.mubr.f32.gmra.mrb[0].mxu0 %v446
    %v727 = vpop.f32.mrb[0].mxu0
    %v728 = vadd.f32 %v639, %v727
    %v729 = vpop.f32.mrb[0].mxu0
    %v730 = vadd.f32 %v641, %v729
    %731 = vmatprep.mubr.f32.mxu0 0.0
    %732 = vmatmul.mubr.f32.gmra.mrb[0].mxu0 %v449
    %v733 = vpop.f32.mrb[0].mxu0
    %v734 = vadd.f32 %v645, %v733
    %v735 = vpop.f32.mrb[0].mxu0
    %v736 = vadd.f32 %v647, %v735
    %737 = vmatprep.mubr.f32.mxu0 0.0
    %738 = vmatmul.mubr.f32.gmra.mrb[0].mxu0 %v451
    %v739 = vpop.f32.mrb[0].mxu0
    %v740 = vadd.f32 %v651, %v739
    %v741 = vpop.f32.mrb[0].mxu0
    %v742 = vadd.f32 %v653, %v741
    %743 = vdwg.mxu0
    %744 = vmatprep.subr.mxu0 %v471
    %745 = vmatpush1.msra.mxu0 %v470
    %746 = vmatprep.subr.mxu0 %v473
    %747 = vmatpush1.msra.mxu0 %v472
    %748 = vmatprep.subr.mxu0 %v475
    %749 = vmatpush1.msra.mxu0 %v474
    %750 = vmatprep.subr.mxu0 %v477
    %751 = vmatpush1.msra.mxu0 %v476
    %752 = vmatprep.subr.mxu0 %v479
    %753 = vmatpush1.msra.mxu0 %v478
    %754 = vmatprep.subr.mxu0 %v481
    %755 = vmatpush1.msra.mxu0 %v480
    %756 = vmatprep.subr.mxu0 %v483
    %757 = vmatpush1.msra.mxu0 %v482
    %758 = vmatprep.subr.mxu0 %v485
    %759 = vmatpush1.msra.mxu0 %v484
    %760 = vmatprep.subr.mxu0 %v487
    %761 = vmatpush1.msra.mxu0 %v486
    %762 = vmatprep.subr.mxu0 %v489
    %763 = vmatpush1.msra.mxu0 %v488
    %764 = vmatprep.subr.mxu0 %v491
    %765 = vmatpush1.msra.mxu0 %v490
    %766 = vmatprep.subr.mxu0 %v493
    %767 = vmatpush1.msra.mxu0 %v492
    %768 = vmatprep.subr.mxu0 %v495
    %769 = vmatpush1.msra.mxu0 %v494
    %770 = vmatprep.subr.mxu0 %v497
    %771 = vmatpush1.msra.mxu0 %v496
    %772 = vmatprep.subr.mxu0 %v499
    %773 = vmatpush1.msra.mxu0 %v498
    %774 = vmatprep.subr.mxu0 %v501
    %775 = vmatpush1.msra.mxu0 %v500
    %776 = vmatprep.subr.mxu0 %v503
    %777 = vmatpush1.msra.mxu0 %v502
    %778 = vmatprep.subr.mxu0 %v505
    %779 = vmatpush1.msra.mxu0 %v504
    %780 = vmatprep.subr.mxu0 %v507
    %781 = vmatpush1.msra.mxu0 %v506
    %782 = vmatprep.subr.mxu0 %v509
    %783 = vmatpush1.msra.mxu0 %v508
    %784 = vmatprep.subr.mxu0 %v511
    %785 = vmatpush1.msra.mxu0 %v510
    %786 = vmatprep.subr.mxu0 %v513
    %787 = vmatpush1.msra.mxu0 %v512
    %788 = vmatprep.subr.mxu0 %v515
    %789 = vmatpush1.msra.mxu0 %v514
    %790 = vmatprep.subr.mxu0 %v517
    %791 = vmatpush1.msra.mxu0 %v516
    %792 = vmatprep.subr.mxu0 %v519
    %793 = vmatpush1.msra.mxu0 %v518
    %794 = vmatprep.subr.mxu0 %v521
    %795 = vmatpush1.msra.mxu0 %v520
    %796 = vmatprep.subr.mxu0 %v523
    %797 = vmatpush1.msra.mxu0 %v522
    %798 = vmatprep.subr.mxu0 %v525
    %799 = vmatpush1.msra.mxu0 %v524
    %800 = vmatprep.subr.mxu0 %v527
    %801 = vmatpush1.msra.mxu0 %v526
    %802 = vmatprep.subr.mxu0 %v529
    %803 = vmatpush1.msra.mxu0 %v528
    %804 = vmatprep.subr.mxu0 %v531
    %805 = vmatpush1.msra.mxu0 %v530
    %806 = vmatprep.subr.mxu0 %v533
    %807 = vmatpush1.msra.mxu0 %v532
    %808 = vmatprep.mubr.f32.mxu0 %v444
    %809 = vmatmul.mubr.f32.gmra.mrb[0].mxu0 %v426
    %v810 = vpop.f32.mrb[0].mxu0
    %v811 = vadd.f32 0.0, %v810
    %v812 = vpop.f32.mrb[0].mxu0
    %v813 = vadd.f32 0.0, %v812
    %814 = vmatprep.mubr.f32.mxu0 %v446
    %815 = vmatmul.mubr.f32.gmra.mrb[0].mxu0 %v428
    %v816 = vpop.f32.mrb[0].mxu0
    %v817 = vadd.f32 0.0, %v816
    %v818 = vpop.f32.mrb[0].mxu0
    %v819 = vadd.f32 0.0, %v818
    %820 = vmatprep.mubr.f32.mxu0 %v449
    %821 = vmatmul.mubr.f32.gmra.mrb[0].mxu0 %v431
    %v822 = vpop.f32.mrb[0].mxu0
    %v823 = vadd.f32 0.0, %v822
    %v824 = vpop.f32.mrb[0].mxu0
    %v825 = vadd.f32 0.0, %v824
    %826 = vmatprep.mubr.f32.mxu0 %v451
    %827 = vmatmul.mubr.f32.gmra.mrb[0].mxu0 %v433
    %v828 = vpop.f32.mrb[0].mxu0
    %v829 = vadd.f32 0.0, %v828
    %v830 = vpop.f32.mrb[0].mxu0
    %v831 = vadd.f32 0.0, %v830
    %832 = vdwg.mxu0
    %833 = vmatprep.subr.mxu0 %v535
    %834 = vmatpush1.msra.mxu0 %v534
    %835 = vmatprep.subr.mxu0 %v537
    %836 = vmatpush1.msra.mxu0 %v536
    %837 = vmatprep.subr.mxu0 %v539
    %838 = vmatpush1.msra.mxu0 %v538
    %839 = vmatprep.subr.mxu0 %v541
    %840 = vmatpush1.msra.mxu0 %v540
    %841 = vmatprep.subr.mxu0 %v543
    %842 = vmatpush1.msra.mxu0 %v542
    %843 = vmatprep.subr.mxu0 %v545
    %844 = vmatpush1.msra.mxu0 %v544
    %845 = vmatprep.subr.mxu0 %v547
    %846 = vmatpush1.msra.mxu0 %v546
    %847 = vmatprep.subr.mxu0 %v549
    %848 = vmatpush1.msra.mxu0 %v548
    %849 = vmatprep.subr.mxu0 %v551
    %850 = vmatpush1.msra.mxu0 %v550
    %851 = vmatprep.subr.mxu0 %v553
    %852 = vmatpush1.msra.mxu0 %v552
    %853 = vmatprep.subr.mxu0 %v555
    %854 = vmatpush1.msra.mxu0 %v554
    %855 = vmatprep.subr.mxu0 %v557
    %856 = vmatpush1.msra.mxu0 %v556
    %857 = vmatprep.subr.mxu0 %v559
    %858 = vmatpush1.msra.mxu0 %v558
    %859 = vmatprep.subr.mxu0 %v561
    %860 = vmatpush1.msra.mxu0 %v560
    %861 = vmatprep.subr.mxu0 %v563
    %862 = vmatpush1.msra.mxu0 %v562
    %863 = vmatprep.subr.mxu0 %v565
    %864 = vmatpush1.msra.mxu0 %v564
    %865 = vmatprep.subr.mxu0 0.0
    %866 = vmatpush1.msra.mxu0 0.0
    %867 = vmatprep.subr.mxu0 0.0
    %868 = vmatpush1.msra.mxu0 0.0
    %869 = vmatprep.subr.mxu0 0.0
    %870 = vmatpush1.msra.mxu0 0.0
    %871 = vmatprep.subr.mxu0 0.0
    %872 = vmatpush1.msra.mxu0 0.0
    %873 = vmatprep.subr.mxu0 0.0
    %874 = vmatpush1.msra.mxu0 0.0
    %875 = vmatprep.subr.mxu0 0.0
    %876 = vmatpush1.msra.mxu0 0.0
    %877 = vmatprep.subr.mxu0 0.0
    %878 = vmatpush1.msra.mxu0 0.0
    %879 = vmatprep.subr.mxu0 0.0
    %880 = vmatpush1.msra.mxu0 0.0
    %881 = vmatprep.subr.mxu0 0.0
    %882 = vmatpush1.msra.mxu0 0.0
    %883 = vmatprep.subr.mxu0 0.0
    %884 = vmatpush1.msra.mxu0 0.0
    %885 = vmatprep.subr.mxu0 0.0
    %886 = vmatpush1.msra.mxu0 0.0
    %887 = vmatprep.subr.mxu0 0.0
    %888 = vmatpush1.msra.mxu0 0.0
    %889 = vmatprep.subr.mxu0 0.0
    %890 = vmatpush1.msra.mxu0 0.0
    %891 = vmatprep.subr.mxu0 0.0
    %892 = vmatpush1.msra.mxu0 0.0
    %893 = vmatprep.subr.mxu0 0.0
    %894 = vmatpush1.msra.mxu0 0.0
    %895 = vmatprep.subr.mxu0 0.0
    %896 = vmatpush1.msra.mxu0 0.0
    %897 = vmatprep.mubr.f32.mxu0 0.0
    %898 = vmatmul.mubr.f32.gmra.mrb[0].mxu0 %v458
    %v899 = vpop.f32.mrb[0].mxu0
    %v900 = vadd.f32 %v811, %v899
    %v901 = vpop.f32.mrb[0].mxu0
    %v902 = vadd.f32 %v813, %v901
    %903 = vmatprep.mubr.f32.mxu0 0.0
    %904 = vmatmul.mubr.f32.gmra.mrb[0].mxu0 %v460
    %v905 = vpop.f32.mrb[0].mxu0
    %v906 = vadd.f32 %v817, %v905
    %v907 = vpop.f32.mrb[0].mxu0
    %v908 = vadd.f32 %v819, %v907
    %909 = vmatprep.mubr.f32.mxu0 0.0
    %910 = vmatmul.mubr.f32.gmra.mrb[0].mxu0 %v463
    %v911 = vpop.f32.mrb[0].mxu0
    %v912 = vadd.f32 %v823, %v911
    %v913 = vpop.f32.mrb[0].mxu0
    %v914 = vadd.f32 %v825, %v913
    %915 = vmatprep.mubr.f32.mxu0 0.0
    %916 = vmatmul.mubr.f32.gmra.mrb[0].mxu0 %v465
    %v917 = vpop.f32.mrb[0].mxu0
    %v918 = vadd.f32 %v829, %v917
    %v919 = vpop.f32.mrb[0].mxu0
    %v920 = vadd.f32 %v831, %v919
    %921 = vdwg.mxu0
    %v922 = vadd.f32 %v722, %v728
    %v923 = vadd.f32 %v922, %v734
    %v924 = vadd.f32 %v923, %v740
    %v925 = vrot.slane %v924, 4
    %v926 = vadd.f32 %v924, %v925
    %v927 = vrot.slane %v926, 2
    %v928 = vadd.f32 %v926, %v927
    %v929 = vrot.slane %v928, 1
    %v930 = vadd.f32 %v928, %v929
    %v931 = vadd.f32 %v724, %v730
    %v932 = vadd.f32 %v931, %v736
    %v933 = vadd.f32 %v932, %v742
    %v934 = vrot.slane %v933, 4
    %v935 = vadd.f32 %v933, %v934
    %v936 = vrot.slane %v935, 2
    %v937 = vadd.f32 %v935, %v936
    %v938 = vrot.slane %v937, 1
    %v939 = vadd.f32 %v937, %v938
    %v940 = vadd.f32 %v900, %v906
    %v941 = vadd.f32 %v940, %v912
    %v942 = vadd.f32 %v941, %v918
    %v943 = vrot.slane %v942, 4
    %v944 = vadd.f32 %v942, %v943
    %v945 = vrot.slane %v944, 2
    %v946 = vadd.f32 %v944, %v945
    %v947 = vrot.slane %v946, 1
    %v948 = vadd.f32 %v946, %v947
    %v949 = vadd.f32 %v902, %v908
    %v950 = vadd.f32 %v949, %v914
    %v951 = vadd.f32 %v950, %v920
    %v952 = vrot.slane %v951, 4
    %v953 = vadd.f32 %v951, %v952
    %v954 = vrot.slane %v953, 2
    %v955 = vadd.f32 %v953, %v954
    %v956 = vrot.slane %v955, 1
    %v957 = vadd.f32 %v955, %v956
    %v958 = vadd.f32 %v930, %v948
    %v959 = vadd.f32 %v939, %v957
    %v960 = vmul.f32 %v722, %v722
    %v961 = vmul.f32 %v724, %v724
    %v962 = vmul.f32 %v728, %v728
    %v963 = vmul.f32 %v730, %v730
    %v964 = vmul.f32 %v734, %v734
    %v965 = vmul.f32 %v736, %v736
    %v966 = vmul.f32 %v740, %v740
    %v967 = vmul.f32 %v742, %v742
    %v968 = vadd.f32 %v960, %v962
    %v969 = vadd.f32 %v968, %v964
    %v970 = vadd.f32 %v969, %v966
    %v971 = vrot.slane %v970, 4
    %v972 = vadd.f32 %v970, %v971
    %v973 = vrot.slane %v972, 2
    %v974 = vadd.f32 %v972, %v973
    %v975 = vrot.slane %v974, 1
    %v976 = vadd.f32 %v974, %v975
    %v977 = vadd.f32 %v961, %v963
    %v978 = vadd.f32 %v977, %v965
    %v979 = vadd.f32 %v978, %v967
    %v980 = vrot.slane %v979, 4
    %v981 = vadd.f32 %v979, %v980
    %v982 = vrot.slane %v981, 2
    %v983 = vadd.f32 %v981, %v982
    %v984 = vrot.slane %v983, 1
    %v985 = vadd.f32 %v983, %v984
    %v986 = vmul.f32 %v900, %v900
    %v987 = vmul.f32 %v902, %v902
    %v988 = vmul.f32 %v906, %v906
    %v989 = vmul.f32 %v908, %v908
    %v990 = vmul.f32 %v912, %v912
    %v991 = vmul.f32 %v914, %v914
    %v992 = vmul.f32 %v918, %v918
    %v993 = vmul.f32 %v920, %v920
    %v994 = vadd.f32 %v986, %v988
    %v995 = vadd.f32 %v994, %v990
    %v996 = vadd.f32 %v995, %v992
    %v997 = vrot.slane %v996, 4
    %v998 = vadd.f32 %v996, %v997
    %v999 = vrot.slane %v998, 2
    %v1000 = vadd.f32 %v998, %v999
    %v1001 = vrot.slane %v1000, 1
    %v1002 = vadd.f32 %v1000, %v1001
    %v1003 = vadd.f32 %v987, %v989
    %v1004 = vadd.f32 %v1003, %v991
    %v1005 = vadd.f32 %v1004, %v993
    %v1006 = vrot.slane %v1005, 4
    %v1007 = vadd.f32 %v1005, %v1006
    %v1008 = vrot.slane %v1007, 2
    %v1009 = vadd.f32 %v1007, %v1008
    %v1010 = vrot.slane %v1009, 1
    %v1011 = vadd.f32 %v1009, %v1010
    %v1012 = vadd.f32 %v976, %v1002
    %v1013 = vadd.f32 %v985, %v1011
    %v1014 = vsel %vm71, %v958, %v1012
    %v1015 = vsel %vm71, %v959, %v1013
    %v1016 = vld [vmem:[%s4] sm:$0xff]
    %v1017 = vld [vmem:[%s4 + $0x8] sm:$0xff]
    %v1018 = vld [vmem:[%s4 + $0x10] sm:$0xff]
    %v1019 = vld [vmem:[%s4 + $0x18] sm:$0xff]
    %v1020 = vld [vmem:[%s4 + $0x20] sm:$0xff]
    %v1021 = vld [vmem:[%s4 + $0x28] sm:$0xff]
    %v1022 = vld [vmem:[%s4 + $0x30] sm:$0xff]
    %v1023 = vld [vmem:[%s4 + $0x38] sm:$0xff]
    %v1024 = vld [vmem:[%s4 + $0x40] sm:$0xff]
    %v1025 = vld [vmem:[%s4 + $0x48] sm:$0xff]
    %v1026 = vld [vmem:[%s4 + $0x50] sm:$0xff]
    %v1027 = vld [vmem:[%s4 + $0x58] sm:$0xff]
    %v1028 = vld [vmem:[%s4 + $0x60] sm:$0xff]
    %v1029 = vld [vmem:[%s4 + $0x68] sm:$0xff]
    %v1030 = vld [vmem:[%s4 + $0x70] sm:$0xff]
    %v1031 = vld [vmem:[%s4 + $0x78] sm:$0xff]
    %v1032 = vld [vmem:[%s4 + $0x80] sm:$0xff]
    %v1033 = vld [vmem:[%s4 + $0x88] sm:$0xff]
    %v1034 = vld [vmem:[%s4 + $0x90] sm:$0xff]
    %v1035 = vld [vmem:[%s4 + $0x98] sm:$0xff]
    %v1036 = vld [vmem:[%s4 + $0xa0] sm:$0xff]
    %v1037 = vld [vmem:[%s4 + $0xa8] sm:$0xff]
    %v1038 = vld [vmem:[%s4 + $0xb0] sm:$0xff]
    %v1039 = vld [vmem:[%s4 + $0xb8] sm:$0xff]
    %v1040 = vld [vmem:[%s4 + $0xc0] sm:$0xff]
    %v1041 = vld [vmem:[%s4 + $0xc8] sm:$0xff]
    %v1042 = vld [vmem:[%s4 + $0xd0] sm:$0xff]
    %v1043 = vld [vmem:[%s4 + $0xd8] sm:$0xff]
    %v1044 = vld [vmem:[%s4 + $0xe0] sm:$0xff]
    %v1045 = vld [vmem:[%s4 + $0xe8] sm:$0xff]
    %v1046 = vld [vmem:[%s4 + $0xf0] sm:$0xff]
    %v1047 = vld [vmem:[%s4 + $0xf8] sm:$0xff]
    %1048 = vmatprep.subr.mxu0 0.0
    %1049 = vmatpush1.msra.mxu0 %v1016
    %1050 = vmatprep.subr.mxu0 0.0
    %1051 = vmatpush1.msra.mxu0 %v1017
    %1052 = vmatprep.subr.mxu0 0.0
    %1053 = vmatpush1.msra.mxu0 %v1018
    %1054 = vmatprep.subr.mxu0 0.0
    %1055 = vmatpush1.msra.mxu0 %v1019
    %1056 = vmatprep.subr.mxu0 0.0
    %1057 = vmatpush1.msra.mxu0 %v1020
    %1058 = vmatprep.subr.mxu0 0.0
    %1059 = vmatpush1.msra.mxu0 %v1021
    %1060 = vmatprep.subr.mxu0 0.0
    %1061 = vmatpush1.msra.mxu0 %v1022
    %1062 = vmatprep.subr.mxu0 0.0
    %1063 = vmatpush1.msra.mxu0 %v1023
    %1064 = vmatprep.subr.mxu0 0.0
    %1065 = vmatpush1.msra.mxu0 %v1024
    %1066 = vmatprep.subr.mxu0 0.0
    %1067 = vmatpush1.msra.mxu0 %v1025
    %1068 = vmatprep.subr.mxu0 0.0
    %1069 = vmatpush1.msra.mxu0 %v1026
    %1070 = vmatprep.subr.mxu0 0.0
    %1071 = vmatpush1.msra.mxu0 %v1027
    %1072 = vmatprep.subr.mxu0 0.0
    %1073 = vmatpush1.msra.mxu0 %v1028
    %1074 = vmatprep.subr.mxu0 0.0
    %1075 = vmatpush1.msra.mxu0 %v1029
    %1076 = vmatprep.subr.mxu0 0.0
    %1077 = vmatpush1.msra.mxu0 %v1030
    %1078 = vmatprep.subr.mxu0 0.0
    %1079 = vmatpush1.msra.mxu0 %v1031
    %1080 = vmatprep.subr.mxu0 0.0
    %1081 = vmatpush1.msra.mxu0 %v1032
    %1082 = vmatprep.subr.mxu0 0.0
    %1083 = vmatpush1.msra.mxu0 %v1033
    %1084 = vmatprep.subr.mxu0 0.0
    %1085 = vmatpush1.msra.mxu0 %v1034
    %1086 = vmatprep.subr.mxu0 0.0
    %1087 = vmatpush1.msra.mxu0 %v1035
    %1088 = vmatprep.subr.mxu0 0.0
    %1089 = vmatpush1.msra.mxu0 %v1036
    %1090 = vmatprep.subr.mxu0 0.0
    %1091 = vmatpush1.msra.mxu0 %v1037
    %1092 = vmatprep.subr.mxu0 0.0
    %1093 = vmatpush1.msra.mxu0 %v1038
    %1094 = vmatprep.subr.mxu0 0.0
    %1095 = vmatpush1.msra.mxu0 %v1039
    %1096 = vmatprep.subr.mxu0 0.0
    %1097 = vmatpush1.msra.mxu0 %v1040
    %1098 = vmatprep.subr.mxu0 0.0
    %1099 = vmatpush1.msra.mxu0 %v1041
    %1100 = vmatprep.subr.mxu0 0.0
    %1101 = vmatpush1.msra.mxu0 %v1042
    %1102 = vmatprep.subr.mxu0 0.0
    %1103 = vmatpush1.msra.mxu0 %v1043
    %1104 = vmatprep.subr.mxu0 0.0
    %1105 = vmatpush1.msra.mxu0 %v1044
    %1106 = vmatprep.subr.mxu0 0.0
    %1107 = vmatpush1.msra.mxu0 %v1045
    %1108 = vmatprep.subr.mxu0 0.0
    %1109 = vmatpush1.msra.mxu0 %v1046
    %1110 = vmatprep.subr.mxu0 0.0
    %1111 = vmatpush1.msra.mxu0 %v1047
    %1112 = vmatprep.mubr.f32.mxu0 %v1015
    %1113 = vmatmul.mubr.f32.gmra.mrb[0].mxu0 %v1014
    %v1114 = vpop.f32.mrb[0].mxu0
    %v1115 = vadd.f32 0.0, %v1114
    %v1116 = vpop.f32.mrb[0].mxu0
    %1117 = vdwg.mxu0
    %v1118 = vrcp.pop 2048.0
    %v1119 = vmul.f32 %v1115, %v1118
    %v1120 = vmul.f32 %v1119, %v1119
    %v1122 = vrot.slane %v1120, 7
    %v1124 = vsub.f32 %v1119, %v1122
    %v1125 = vmax.f32 %v1124, 0.0
    %v1126 = vsel %vm71, %v1119, %v1125
    %v1127 = vld [vmem:[%s5] sm:$0xff]
    %v1128 = vld [vmem:[%s5 + $0x8] sm:$0xff]
    %vm1129 = vcmask 64512
    %v1131 = vsel %vm1129, %v1126, 0
    %1133 = vmatprep.subr.mxu0 %v1128
    %1134 = vmatpush1.msra.mxu0 %v1127
    %1135 = vmatprep.subr.mxu0 0.0
    %1136 = vmatpush1.msra.mxu0 0.0
    %1137 = vmatprep.subr.mxu0 0.0
    %1138 = vmatpush1.msra.mxu0 0.0
    %1139 = vmatprep.subr.mxu0 0.0
    %1140 = vmatpush1.msra.mxu0 0.0
    %1141 = vmatprep.subr.mxu0 0.0
    %1142 = vmatpush1.msra.mxu0 0.0
    %1143 = vmatprep.subr.mxu0 0.0
    %1144 = vmatpush1.msra.mxu0 0.0
    %1145 = vmatprep.subr.mxu0 0.0
    %1146 = vmatpush1.msra.mxu0 0.0
    %1147 = vmatprep.subr.mxu0 0.0
    %1148 = vmatpush1.msra.mxu0 0.0
    %1149 = vmatprep.subr.mxu0 0.0
    %1150 = vmatpush1.msra.mxu0 0.0
    %1151 = vmatprep.subr.mxu0 0.0
    %1152 = vmatpush1.msra.mxu0 0.0
    %1153 = vmatprep.subr.mxu0 0.0
    %1154 = vmatpush1.msra.mxu0 0.0
    %1155 = vmatprep.subr.mxu0 0.0
    %1156 = vmatpush1.msra.mxu0 0.0
    %1157 = vmatprep.subr.mxu0 0.0
    %1158 = vmatpush1.msra.mxu0 0.0
    %1159 = vmatprep.subr.mxu0 0.0
    %1160 = vmatpush1.msra.mxu0 0.0
    %1161 = vmatprep.subr.mxu0 0.0
    %1162 = vmatpush1.msra.mxu0 0.0
    %1163 = vmatprep.subr.mxu0 0.0
    %1164 = vmatpush1.msra.mxu0 0.0
    %1165 = vmatprep.subr.mxu0 0.0
    %1166 = vmatpush1.msra.mxu0 0.0
    %1167 = vmatprep.subr.mxu0 0.0
    %1168 = vmatpush1.msra.mxu0 0.0
    %1169 = vmatprep.subr.mxu0 0.0
    %1170 = vmatpush1.msra.mxu0 0.0
    %1171 = vmatprep.subr.mxu0 0.0
    %1172 = vmatpush1.msra.mxu0 0.0
    %1173 = vmatprep.subr.mxu0 0.0
    %1174 = vmatpush1.msra.mxu0 0.0
    %1175 = vmatprep.subr.mxu0 0.0
    %1176 = vmatpush1.msra.mxu0 0.0
    %1177 = vmatprep.subr.mxu0 0.0
    %1178 = vmatpush1.msra.mxu0 0.0
    %1179 = vmatprep.subr.mxu0 0.0
    %1180 = vmatpush1.msra.mxu0 0.0
    %1181 = vmatprep.subr.mxu0 0.0
    %1182 = vmatpush1.msra.mxu0 0.0
    %1183 = vmatprep.subr.mxu0 0.0
    %1184 = vmatpush1.msra.mxu0 0.0
    %1185 = vmatprep.subr.mxu0 0.0
    %1186 = vmatpush1.msra.mxu0 0.0
    %1187 = vmatprep.subr.mxu0 0.0
    %1188 = vmatpush1.msra.mxu0 0.0
    %1189 = vmatprep.subr.mxu0 0.0
    %1190 = vmatpush1.msra.mxu0 0.0
    %1191 = vmatprep.subr.mxu0 0.0
    %1192 = vmatpush1.msra.mxu0 0.0
    %1193 = vmatprep.subr.mxu0 0.0
    %1194 = vmatpush1.msra.mxu0 0.0
    %1195 = vmatprep.subr.mxu0 0.0
    %1196 = vmatpush1.msra.mxu0 0.0
    %1197 = vmatprep.mubr.f32.mxu0 0.0
    %1198 = vmatmul.mubr.f32.gmra.mrb[0].mxu0 %v1131
    %v1199 = vpop.f32.mrb[0].mxu0
    %v1200 = vadd.f32 0.0, %v1199
    %v1201 = vpop.f32.mrb[0].mxu0
    %v1202 = vadd.f32 0.0, %v1201
    %1203 = vdwg.mxu0
    %v1204 = vld [vmem:[%s6] sm:$0x3]
    %v1205 = vadd.f32 %v1200, 1e-05
    %v1206 = vadd.f32 %v1202, 1e-05
    %v1207 = vrsqrt.pop %v1205
    %v1208 = vrsqrt.pop %v1206
    %v1211 = vcombine.low %v1207, %v1208
    %v1213 = vunpack.c.l.s4 1966171168
    %v1214 = vunpack.c.0.s8 %v1213
    %v1215 = vlaneseq
    %v1216 = vshrl.u32 %v1215, 7
    %v1217 = vsub.s32 %v1214, %v1216
    %v1218 = vrot.slane %v1211, %v1217
    %v1219 = vcombine.high %v1218, %v1218
    %v1221 = vunpack.c.l.s4 1966171168
    %v1222 = vunpack.c.0.s8 %v1221
    %v1223 = vlaneseq
    %v1224 = vshrl.u32 %v1223, 7
    %v1225 = vsub.s32 %v1222, %v1224
    %v1226 = vrot.slane %v1219, %v1225
    %v1228 = vmul.f32 %v1204, %v1226
    %v1229 = vld [vmem:[%s7] sm:$0x3]
    %v1231 = vlaneseq
    %v1232 = vshrl.u32 %v1231, 7
    %v1233 = vsub.s32 0, %v1232
    %v1234 = vrot.slane %v1228, %v1233
    %v1235 = vlaneseq
    %v1236 = vshrl.u32 %v1235, 7
    %v1237 = vsub.s32 1, %v1236
    %v1238 = vrot.slane %v1228, %v1237
    %v1241 = vmul.f32 %v1200, %v1234
    %v1242 = vmul.f32 %v1202, %v1238
    %v1245 = vcombine.low %v1241, %v1242
    %v1247 = vunpack.c.l.s4 1966171168
    %v1248 = vunpack.c.0.s8 %v1247
    %v1249 = vlaneseq
    %v1250 = vshrl.u32 %v1249, 7
    %v1251 = vsub.s32 %v1248, %v1250
    %v1252 = vrot.slane %v1245, %v1251
    %v1254 = vunpack.c.l.s4 1966171168
    %v1255 = vunpack.c.0.s8 %v1254
    %v1256 = vlaneseq
    %v1257 = vshrl.u32 %v1256, 7
    %v1258 = vsub.s32 %v1255, %v1257
    %v1259 = vrot.slane %v1252, %v1258
    %v1261 = vsub.f32 %v1229, %v1259
    %v1262 = vmul.f32 %v722, %v1234
    %v1263 = vmul.f32 %v724, %v1238
    %v1264 = vmul.f32 %v728, %v1234
    %v1265 = vmul.f32 %v730, %v1238
    %v1266 = vmul.f32 %v734, %v1234
    %v1267 = vmul.f32 %v736, %v1238
    %v1268 = vmul.f32 %v740, %v1234
    %v1269 = vmul.f32 %v742, %v1238
    %v1271 = vlaneseq
    %v1272 = vshrl.u32 %v1271, 7
    %v1273 = vsub.s32 0, %v1272
    %v1274 = vrot.slane %v1261, %v1273
    %v1275 = vlaneseq
    %v1276 = vshrl.u32 %v1275, 7
    %v1277 = vsub.s32 1, %v1276
    %v1278 = vrot.slane %v1261, %v1277
    %v1281 = vadd.f32 %v1262, %v1274
    %v1282 = vadd.f32 %v1263, %v1278
    %v1283 = vadd.f32 %v1264, %v1274
    %v1284 = vadd.f32 %v1265, %v1278
    %v1285 = vadd.f32 %v1266, %v1274
    %v1286 = vadd.f32 %v1267, %v1278
    %v1287 = vadd.f32 %v1268, %v1274
    %v1288 = vadd.f32 %v1269, %v1278
    %v1289 = vmul.f32 %v900, %v1234
    %v1290 = vmul.f32 %v902, %v1238
    %v1291 = vmul.f32 %v906, %v1234
    %v1292 = vmul.f32 %v908, %v1238
    %v1293 = vmul.f32 %v912, %v1234
    %v1294 = vmul.f32 %v914, %v1238
    %v1295 = vmul.f32 %v918, %v1234
    %v1296 = vmul.f32 %v920, %v1238
    %v1297 = vadd.f32 %v1289, %v1274
    %v1298 = vadd.f32 %v1290, %v1278
    %v1299 = vadd.f32 %v1291, %v1274
    %v1300 = vadd.f32 %v1292, %v1278
    %v1301 = vadd.f32 %v1293, %v1274
    %v1302 = vadd.f32 %v1294, %v1278
    %v1303 = vadd.f32 %v1295, %v1274
    %v1304 = vadd.f32 %v1296, %v1278
    %vm1305 = vcmp.gt.f32.partialorder %v1281, 0.0
    %vm1306 = vcmp.gt.f32.partialorder %v1282, 0.0
    %vm1307 = vcmp.gt.f32.partialorder %v1283, 0.0
    %vm1308 = vcmp.gt.f32.partialorder %v1284, 0.0
    %vm1309 = vcmp.gt.f32.partialorder %v1285, 0.0
    %vm1310 = vcmp.gt.f32.partialorder %v1286, 0.0
    %vm1311 = vcmp.gt.f32.partialorder %v1287, 0.0
    %vm1312 = vcmp.gt.f32.partialorder %v1288, 0.0
    %v1313 = vmul.f32 %v361, %v1281
    %v1314 = vmul.f32 %v361, %v1282
    %v1315 = vmul.f32 %v361, %v1283
    %v1316 = vmul.f32 %v361, %v1284
    %v1317 = vmul.f32 %v361, %v1285
    %v1318 = vmul.f32 %v361, %v1286
    %v1319 = vmul.f32 %v361, %v1287
    %v1320 = vmul.f32 %v361, %v1288
    %v1321 = vsel %vm1305, %v1281, %v1313
    %v1322 = vsel %vm1306, %v1282, %v1314
    %v1323 = vsel %vm1307, %v1283, %v1315
    %v1324 = vsel %vm1308, %v1284, %v1316
    %v1325 = vsel %vm1309, %v1285, %v1317
    %v1326 = vsel %vm1310, %v1286, %v1318
    %v1327 = vsel %vm1311, %v1287, %v1319
    %v1328 = vsel %vm1312, %v1288, %v1320
    %vm1329 = vcmp.gt.f32.partialorder %v1297, 0.0
    %vm1330 = vcmp.gt.f32.partialorder %v1298, 0.0
    %vm1331 = vcmp.gt.f32.partialorder %v1299, 0.0
    %vm1332 = vcmp.gt.f32.partialorder %v1300, 0.0
    %vm1333 = vcmp.gt.f32.partialorder %v1301, 0.0
    %vm1334 = vcmp.gt.f32.partialorder %v1302, 0.0
    %vm1335 = vcmp.gt.f32.partialorder %v1303, 0.0
    %vm1336 = vcmp.gt.f32.partialorder %v1304, 0.0
    %v1337 = vmul.f32 %v361, %v1297
    %v1338 = vmul.f32 %v361, %v1298
    %v1339 = vmul.f32 %v361, %v1299
    %v1340 = vmul.f32 %v361, %v1300
    %v1341 = vmul.f32 %v361, %v1301
    %v1342 = vmul.f32 %v361, %v1302
    %v1343 = vmul.f32 %v361, %v1303
    %v1344 = vmul.f32 %v361, %v1304
    %v1345 = vsel %vm1329, %v1297, %v1337
    %v1346 = vsel %vm1330, %v1298, %v1338
    %v1347 = vsel %vm1331, %v1299, %v1339
    %v1348 = vsel %vm1332, %v1300, %v1340
    %v1349 = vsel %vm1333, %v1301, %v1341
    %v1350 = vsel %vm1334, %v1302, %v1342
    %v1351 = vsel %vm1335, %v1303, %v1343
    %v1352 = vsel %vm1336, %v1304, %v1344
    %1353 = vst [vmem:[#allocation8] sm:$0xff] %v1321
    %1354 = vst [vmem:[#allocation8 + $0x8] sm:$0xff] %v1322
    %1355 = vst [vmem:[#allocation8 + $0x20] sm:$0xff] %v1323
    %1356 = vst [vmem:[#allocation8 + $0x28] sm:$0xff] %v1324
    %1357 = vst [vmem:[#allocation8 + $0x40] sm:$0xff] %v1325
    %1358 = vst [vmem:[#allocation8 + $0x48] sm:$0xff] %v1326
    %1359 = vst [vmem:[#allocation8 + $0x60] sm:$0xff] %v1327
    %1360 = vst [vmem:[#allocation8 + $0x68] sm:$0xff] %v1328
    %1361 = vst [vmem:[#allocation8 + $0x10] sm:$0xff] %v1345
    %1362 = vst [vmem:[#allocation8 + $0x18] sm:$0xff] %v1346
    %1363 = vst [vmem:[#allocation8 + $0x30] sm:$0xff] %v1347
    %1364 = vst [vmem:[#allocation8 + $0x38] sm:$0xff] %v1348
    %1365 = vst [vmem:[#allocation8 + $0x50] sm:$0xff] %v1349
    %1366 = vst [vmem:[#allocation8 + $0x58] sm:$0xff] %v1350
    %1367 = vst [vmem:[#allocation8 + $0x70] sm:$0xff] %v1351
    %1368 = vst [vmem:[#allocation8 + $0x78] sm:$0xff] %v1352
    // Predicated region
    $region46: #{tpu_custom_call.1} parent=1 // pred_check
      _
    $region47: #{tpu_custom_call.1} parent=1 // pred_check_branch
      %1370 = sbr.rel (0) target = $region49
    $region48: #{tpu_custom_call.1} parent=1 // pred_region
      %s1372 = ssub.s32 2048, 2048
      %1373 = vsyncadd [#allocation5], %s1372
      %s1374 = sshll.u32 [#allocation8], 4
      %s1375 = int_to_ptr.vmem [resolvable:$true] %s1374
      %1380 = dma.vmem_to_hbm [thread:$0]  %s1375, 2048, %s9, [#allocation5], 512, 512, 32
    $region49: #{tpu_custom_call.1} parent=1 // pred_fallthru
      _
    // Predicated region
    $region50: #{tpu_custom_call.1} parent=1 // pred_check
      _
    $region51: #{tpu_custom_call.1} parent=1 // pred_check_branch
      %1382 = sbr.rel (0) target = $region53
    $region52: #{tpu_custom_call.1} parent=1 // pred_region
      %1383 = dma.done [#allocation5], 2048
    $region53: #{tpu_custom_call.1} parent=1 // pred_fallthru
      _
    %1384 = vsyncpa [#allocation4], 1
    %1385 = vsyncpa [#allocation7], 1
    %1386 = vsyncpa [#allocation5], 1

</llo_original>
